<compile_context>
chip_gen: v7x
topology: tpu7x:2x2x1
jax: 0.10.0
libtpu: 0.0.40
codegen_flags: <defaults>
</compile_context>

<pallas_src>
import functools
import math

import jax
import jax.numpy as jnp
from jax import lax
from jax.experimental import pallas as pl
from jax.experimental.pallas import tpu as pltpu

LN_EPS = 1e-5  # PyTorch nn.LayerNorm default


def _layernorm(x, gamma, beta):
    mu = jnp.mean(x, axis=-1, keepdims=True)
    var = jnp.mean((x - mu) ** 2, axis=-1, keepdims=True)
    return (x - mu) * lax.rsqrt(var + LN_EPS) * gamma + beta


# ---------------------------------------------------------------------------
# Fused kernel: grid=(depth,), one grid step == one transformer layer.
# The output ref is the VMEM-resident carry for x across layers.
# ---------------------------------------------------------------------------
def transformer_layers_kernel(x_ref, ln1g_ref, ln1b_ref, wqkv_ref, wo_ref, bo_ref,
                              ln2g_ref, ln2b_ref, w1_ref, b1_ref, w2_ref, b2_ref,
                              o_ref, attn_sc,
                              *, batch, tokens, heads, dim_head):
    layer = pl.program_id(0)
    inner = heads * dim_head

    @pl.when(layer == 0)
    def _():
        o_ref[...] = x_ref[...]          # load x into the resident carry once

    x = o_ref[...]                        # (BN, D) float32

    # ---------------- PreNorm + Attention + residual ----------------
    xn = _layernorm(x, ln1g_ref[0], ln1b_ref[0])                 # (BN, D)

    # Fused, lane-dense QKV projection: one MXU push per layer.
    # Attention scale is pre-folded into the q columns of wqkv.
    qkv = jnp.dot(xn, wqkv_ref[0], preferred_element_type=jnp.float32)  # (BN, 3*inner)

    def split_heads(off):
        # Static lane slices of width dim_head, stacked head-leading, then the
        # token axis is split per batch element so attention never crosses
        # batch boundaries:  (H, B*N, Dh) -> (H*B, N, Dh).
        # TODO(synk): assumes tokens % 8 == 0 (f32 sublane tile); pad N first
        # for real ViT sequence lengths like 197.
        hs = jnp.stack(
            [qkv[:, off + h * dim_head: off + (h + 1) * dim_head]
             for h in range(heads)], axis=0)                      # (H, BN, Dh)
        return hs.reshape(heads * batch, tokens, dim_head)        # (H*B, N, Dh)

    q = split_heads(0)
    k = split_heads(inner)
    v = split_heads(2 * inner)

    # Grouped attention over all (head, batch) pairs at once (leading batch dim).
    dots = jnp.einsum('gqd,gkd->gqk', q, k,
                      preferred_element_type=jnp.float32)         # (H*B, N, N)
    dots = dots - jnp.max(dots, axis=-1, keepdims=True)
    e = jnp.exp(dots)
    attn = e / jnp.sum(e, axis=-1, keepdims=True)                 # exact softmax
    out = jnp.einsum('gqk,gkd->gqd', attn, v,
                     preferred_element_type=jnp.float32)          # (H*B, N, Dh)

    # Reassemble heads lane-dense: head h -> lanes [h*Dh:(h+1)*Dh] of (BN, inner).
    out = out.reshape(heads, batch * tokens, dim_head)            # (H, BN, Dh)
    for h in range(heads):
        attn_sc[:, h * dim_head:(h + 1) * dim_head] = out[h]
    cat = attn_sc[...]                                            # (BN, inner)

    # Single lane-dense output projection + residual.
    x = x + jnp.dot(cat, wo_ref[0], preferred_element_type=jnp.float32) + bo_ref[0]

    # ---------------- PreNorm + FeedForward + residual ----------------
    xn2 = _layernorm(x, ln2g_ref[0], ln2b_ref[0])
    h = jnp.dot(xn2, w1_ref[0], preferred_element_type=jnp.float32) + b1_ref[0]
    h = 0.5 * h * (1.0 + lax.erf(h * (1.0 / math.sqrt(2.0))))     # exact GELU (nn.GELU)
    y = jnp.dot(h, w2_ref[0], preferred_element_type=jnp.float32) + b2_ref[0]

    o_ref[...] = x + y                                            # carry to next layer


# ---------------------------------------------------------------------------
# Wrapper
# ---------------------------------------------------------------------------
def _transformer_forward_impl(x, packed, *, heads, dim_head):
    B, N, D = x.shape
    depth = packed['wqkv'].shape[0]
    BN = B * N
    inner = heads * dim_head

    kernel = functools.partial(transformer_layers_kernel,
                               batch=B, tokens=N, heads=heads, dim_head=dim_head)

    def per_layer_spec(arr):
        block = (1,) + arr.shape[1:]
        zeros = (0,) * (arr.ndim - 1)
        return pl.BlockSpec(block, lambda l, z=zeros: (l,) + z)

    order = ['ln1_g', 'ln1_b', 'wqkv', 'wo', 'bo',
             'ln2_g', 'ln2_b', 'w1', 'b1', 'w2', 'b2']
    args = [packed[k] for k in order]

    out = pl.pallas_call(
        kernel,
        out_shape=jax.ShapeDtypeStruct((BN, D), jnp.float32),
        grid=(depth,),
        in_specs=[pl.BlockSpec((BN, D), lambda l: (0, 0))]        # x: fetched once
                 + [per_layer_spec(a) for a in args],             # weights: streamed per layer
        out_specs=pl.BlockSpec((BN, D), lambda l: (0, 0)),        # single writeback at end
        scratch_shapes=[pltpu.VMEM((BN, inner), jnp.float32)],    # lane-dense attn output
        input_output_aliases={0: 0},                              # x buffer reused for output
        compiler_params=pltpu.CompilerParams(
            dimension_semantics=("arbitrary",)),                  # layers are sequential
    )(x.reshape(BN, D), *args)
    return out.reshape(B, N, D)


transformer_forward = jax.jit(_transformer_forward_impl,
                              static_argnames=("heads", "dim_head"))


# ---------------------------------------------------------------------------
# Parameters: natural (PyTorch-like) layout + packing into the kernel layout.
# init matches init_weights: xavier_normal_ weights, zero bias, LN weight=1/bias=0.
# ---------------------------------------------------------------------------
def _xavier_normal(key, fan_in, fan_out):
    std = math.sqrt(2.0 / (fan_in + fan_out))
    return std * jax.random.normal(key, (fan_in, fan_out), dtype=jnp.float32)


def init_transformer_params(key, depth, dim, heads, dim_head, mlp_dim_ratio):
    inner = heads * dim_head
    hidden = dim * mlp_dim_ratio
    layers = []
    for _ in range(depth):
        key, k_qkv, k_out, k_w1, k_w2 = jax.random.split(key, 5)
        layers.append({
            'ln1_g': jnp.ones((dim,), jnp.float32),
            'ln1_b': jnp.zeros((dim,), jnp.float32),
            'wqkv': _xavier_normal(k_qkv, dim, 3 * inner),   # to_qkv (bias=False), (in, out)
            'wout': _xavier_normal(k_out, inner, dim),       # to_out Linear
            'bout': jnp.zeros((dim,), jnp.float32),
            'ln2_g': jnp.ones((dim,), jnp.float32),
            'ln2_b': jnp.zeros((dim,), jnp.float32),
            'w1': _xavier_normal(k_w1, dim, hidden),
            'b1': jnp.zeros((hidden,), jnp.float32),
            'w2': _xavier_normal(k_w2, hidden, dim),
            'b2': jnp.zeros((dim,), jnp.float32),
        })
    return layers


def pack_params(layers, heads, dim_head):
    """Stack per-layer params along a leading depth axis, lane-dense layouts only.
    The attention scale is folded into the q columns of the fused QKV weight."""
    scale = dim_head ** (-0.5)
    inner = heads * dim_head

    def stack(fn):
        return jnp.stack([fn(p) for p in layers], axis=0)

    def fold_scale(p):
        w = p['wqkv']                                             # (D, 3*inner)
        return jnp.concatenate([w[:, :inner] * scale, w[:, inner:]], axis=1)

    return {
        'ln1_g': stack(lambda p: p['ln1_g'][None, :]),            # (depth, 1, D)
        'ln1_b': stack(lambda p: p['ln1_b'][None, :]),
        'wqkv': stack(fold_scale),                                # (depth, D, 3*inner)
        'wo': stack(lambda p: p['wout']),                         # (depth, inner, D)
        'bo': stack(lambda p: p['bout'][None, :]),
        'ln2_g': stack(lambda p: p['ln2_g'][None, :]),
        'ln2_b': stack(lambda p: p['ln2_b'][None, :]),
        'w1': stack(lambda p: p['w1']),                           # (depth, D, hidden)
        'b1': stack(lambda p: p['b1'][None, :]),
        'w2': stack(lambda p: p['w2']),                           # (depth, hidden, D)
        'b2': stack(lambda p: p['b2'][None, :]),
    }


# ---------------------------------------------------------------------------
# Pure-JAX reference (mirrors the PyTorch forward) for a sanity check.
# ---------------------------------------------------------------------------
def transformer_reference(x, layers, heads, dim_head):
    scale = dim_head ** (-0.5)
    B, N, _ = x.shape
    for p in layers:
        xn = _layernorm(x, p['ln1_g'], p['ln1_b'])
        qkv = xn @ p['wqkv']
        q, k, v = jnp.split(qkv, 3, axis=-1)

        def heads_first(t):
            return t.reshape(B, N, heads, dim_head).transpose(0, 2, 1, 3)

        q, k, v = heads_first(q), heads_first(k), heads_first(v)
        dots = jnp.einsum('bhid,bhjd->bhij', q, k) * scale
        attn = jax.nn.softmax(dots, axis=-1)
        out = jnp.einsum('bhij,bhjd->bhid', attn, v)
        out = out.transpose(0, 2, 1, 3).reshape(B, N, heads * dim_head)
        x = x + out @ p['wout'] + p['bout']

        xn2 = _layernorm(x, p['ln2_g'], p['ln2_b'])
        h = xn2 @ p['w1'] + p['b1']
        h = 0.5 * h * (1.0 + lax.erf(h * (1.0 / math.sqrt(2.0))))
        x = x + h @ p['w2'] + p['b2']
    return x


if __name__ == "__main__":
    # Small shapes consistent with the module: dim=32, heads=4, dim_head=8
    # (inner_dim=32), mlp_dim_ratio=2 (hidden=64), depth=2, seq=8, batch=2.
    B, N, D = 2, 8, 32
    heads, dim_head = 4, 8
    mlp_dim_ratio, depth = 2, 2

    root = jax.random.PRNGKey(0)
    xkey, pkey = jax.random.split(root)
    x = jax.random.normal(xkey, (B, N, D), dtype=jnp.float32)

    layers = init_transformer_params(pkey, depth, D, heads, dim_head, mlp_dim_ratio)
    packed = pack_params(layers, heads, dim_head)

    y = transformer_forward(x, packed, heads=heads, dim_head=dim_head)
    y = jax.block_until_ready(y)
    assert y.shape == (B, N, D) and y.dtype == jnp.float32

    # Sanity check against the pure-JAX reference (exact softmax in the kernel
    # now, so the tolerance is tight).
    y_ref = transformer_reference(x, layers, heads, dim_head)
    max_err = float(jnp.max(jnp.abs(y - y_ref)))
    assert bool(jnp.allclose(y, y_ref, atol=2e-4, rtol=2e-4)), max_err

    print("KERNEL_OK")
</pallas_src>

<mosaic_0001>
module attributes {stable_mosaic.version = 11 : i64} {
  func.func @transformer_layers_kernel(%arg0: i32, %arg1: memref<16x32xf32, #tpu.memory_space<vmem>>, %arg2: memref<1x1x32xf32, #tpu.memory_space<vmem>>, %arg3: memref<1x1x32xf32, #tpu.memory_space<vmem>>, %arg4: memref<1x32x96xf32, #tpu.memory_space<vmem>>, %arg5: memref<1x32x32xf32, #tpu.memory_space<vmem>>, %arg6: memref<1x1x32xf32, #tpu.memory_space<vmem>>, %arg7: memref<1x1x32xf32, #tpu.memory_space<vmem>>, %arg8: memref<1x1x32xf32, #tpu.memory_space<vmem>>, %arg9: memref<1x32x64xf32, #tpu.memory_space<vmem>>, %arg10: memref<1x1x64xf32, #tpu.memory_space<vmem>>, %arg11: memref<1x64x32xf32, #tpu.memory_space<vmem>>, %arg12: memref<1x1x32xf32, #tpu.memory_space<vmem>>, %arg13: memref<16x32xf32, #tpu.memory_space<vmem>>, %arg14: memref<16x32xf32, #tpu.memory_space<vmem>>) attributes {dimension_semantics = [#tpu.dimension_semantics<arbitrary>], iteration_bounds = array<i64: 2>, scalar_prefetch = 0 : i64, scratch_operands = 1 : i64, tpu.core_type = #tpu.core_type<tc>, window_params = [{pipeline_mode = #tpu.pipeline_mode<synchronous>, transform_indices = @transform_0, window_bounds = array<i64: 16, 32>}, {transform_indices = @transform_1, window_bounds = array<i64: 1, 1, 32>}, {transform_indices = @transform_2, window_bounds = array<i64: 1, 1, 32>}, {transform_indices = @transform_3, window_bounds = array<i64: 1, 32, 96>}, {transform_indices = @transform_4, window_bounds = array<i64: 1, 32, 32>}, {transform_indices = @transform_5, window_bounds = array<i64: 1, 1, 32>}, {transform_indices = @transform_6, window_bounds = array<i64: 1, 1, 32>}, {transform_indices = @transform_7, window_bounds = array<i64: 1, 1, 32>}, {transform_indices = @transform_8, window_bounds = array<i64: 1, 32, 64>}, {transform_indices = @transform_9, window_bounds = array<i64: 1, 1, 64>}, {transform_indices = @transform_10, window_bounds = array<i64: 1, 64, 32>}, {transform_indices = @transform_11, window_bounds = array<i64: 1, 1, 32>}, {pipeline_mode = #tpu.pipeline_mode<synchronous>, transform_indices = @transform_12, window_bounds = array<i64: 16, 32>}]} {
    %c0_i32 = arith.constant 0 : i32
    %0 = arith.cmpi eq, %arg0, %c0_i32 : i32
    %1 = arith.extui %0 : i1 to i32
    %c0_i32_0 = arith.constant 0 : i32
    %2 = arith.cmpi ne, %1, %c0_i32_0 : i32
    scf.if %2 {
      %c0_64 = arith.constant 0 : index
      %c0_65 = arith.constant 0 : index
      %146 = vector.load %arg1[%c0_64, %c0_65] : memref<16x32xf32, #tpu.memory_space<vmem>>, vector<16x32xf32>
      %c0_66 = arith.constant 0 : index
      %c0_67 = arith.constant 0 : index
      %147 = vector.load %arg13[%c0_66, %c0_67] : memref<16x32xf32, #tpu.memory_space<vmem>>, vector<16x32xf32>
      tpu.vector_store %arg13[%c0_66, %c0_67], %146 {strides = array<i32>} : memref<16x32xf32, #tpu.memory_space<vmem>>, vector<16x32xf32>,
    } else {
    }
    %c0 = arith.constant 0 : index
    %c0_1 = arith.constant 0 : index
    %3 = vector.load %arg13[%c0, %c0_1] : memref<16x32xf32, #tpu.memory_space<vmem>>, vector<16x32xf32>
    %c0_2 = arith.constant 0 : index
    %c0_3 = arith.constant 0 : index
    %c0_4 = arith.constant 0 : index
    %4 = vector.load %arg2[%c0_2, %c0_3, %c0_4] : memref<1x1x32xf32, #tpu.memory_space<vmem>>, vector<1x1x32xf32>
    %5 = vector.shape_cast %4 : vector<1x1x32xf32> to vector<1x32xf32>
    %c0_5 = arith.constant 0 : index
    %c0_6 = arith.constant 0 : index
    %c0_7 = arith.constant 0 : index
    %6 = vector.load %arg3[%c0_5, %c0_6, %c0_7] : memref<1x1x32xf32, #tpu.memory_space<vmem>>, vector<1x1x32xf32>
    %7 = vector.shape_cast %6 : vector<1x1x32xf32> to vector<1x32xf32>
    %cst = arith.constant dense<0.000000e+00> : vector<16xf32>
    %8 = vector.multi_reduction <add>, %3, %cst [1] : vector<16x32xf32> to vector<16xf32>
    %9 = vector.shape_cast %8 : vector<16xf32> to vector<16x1xf32>
    %cst_8 = arith.constant 3.200000e+01 : f32
    %10 = vector.broadcast %cst_8 : f32 to vector<16x1xf32>
    %11 = arith.divf %9, %10 : vector<16x1xf32>
    %12 = vector.broadcast %11 : vector<16x1xf32> to vector<16x32xf32>
    %13 = arith.subf %3, %12 : vector<16x32xf32>
    %14 = arith.mulf %13, %13 : vector<16x32xf32>
    %cst_9 = arith.constant dense<0.000000e+00> : vector<16xf32>
    %15 = vector.multi_reduction <add>, %14, %cst_9 [1] : vector<16x32xf32> to vector<16xf32>
    %16 = vector.shape_cast %15 : vector<16xf32> to vector<16x1xf32>
    %cst_10 = arith.constant 3.200000e+01 : f32
    %17 = vector.broadcast %cst_10 : f32 to vector<16x1xf32>
    %18 = arith.divf %16, %17 : vector<16x1xf32>
    %19 = vector.broadcast %11 : vector<16x1xf32> to vector<16x32xf32>
    %20 = arith.subf %3, %19 : vector<16x32xf32>
    %cst_11 = arith.constant 9.99999974E-6 : f32
    %21 = vector.broadcast %cst_11 : f32 to vector<16x1xf32>
    %22 = arith.addf %18, %21 : vector<16x1xf32>
    %23 = math.rsqrt %22 : vector<16x1xf32>
    %24 = vector.broadcast %23 : vector<16x1xf32> to vector<16x32xf32>
    %25 = arith.mulf %20, %24 : vector<16x32xf32>
    %26 = vector.broadcast %5 : vector<1x32xf32> to vector<16x32xf32>
    %27 = arith.mulf %25, %26 : vector<16x32xf32>
    %28 = vector.broadcast %7 : vector<1x32xf32> to vector<16x32xf32>
    %29 = arith.addf %27, %28 : vector<16x32xf32>
    %c0_12 = arith.constant 0 : index
    %c0_13 = arith.constant 0 : index
    %c0_14 = arith.constant 0 : index
    %30 = vector.load %arg4[%c0_12, %c0_13, %c0_14] : memref<1x32x96xf32, #tpu.memory_space<vmem>>, vector<1x32x96xf32>
    %31 = vector.shape_cast %30 : vector<1x32x96xf32> to vector<32x96xf32>
    %cst_15 = arith.constant dense<0.000000e+00> : vector<16x96xf32>
    %32 = tpu.matmul %29, %31, %cst_15 {dimension_numbers = #tpu.dot_dimension_numbers<[1], [0], [0], [1], [0, 0, 1, 1], [], []>} : vector<16x32xf32>, vector<32x96xf32>, vector<16x96xf32> -> vector<16x96xf32>
    %33 = vector.extract_strided_slice %32 {offsets = [0, 0], sizes = [16, 8], strides = [1, 1]} : vector<16x96xf32> to vector<16x8xf32>
    %34 = vector.extract_strided_slice %32 {offsets = [0, 8], sizes = [16, 8], strides = [1, 1]} : vector<16x96xf32> to vector<16x8xf32>
    %35 = vector.extract_strided_slice %32 {offsets = [0, 16], sizes = [16, 8], strides = [1, 1]} : vector<16x96xf32> to vector<16x8xf32>
    %36 = vector.extract_strided_slice %32 {offsets = [0, 24], sizes = [16, 8], strides = [1, 1]} : vector<16x96xf32> to vector<16x8xf32>
    %37 = vector.shape_cast %33 : vector<16x8xf32> to vector<1x16x8xf32>
    %38 = vector.shape_cast %34 : vector<16x8xf32> to vector<1x16x8xf32>
    %39 = vector.shape_cast %35 : vector<16x8xf32> to vector<1x16x8xf32>
    %40 = vector.shape_cast %36 : vector<16x8xf32> to vector<1x16x8xf32>
    %41 = tpu.concatenate %37, %38, %39, %40 in 0 : vector<1x16x8xf32>, vector<1x16x8xf32>, vector<1x16x8xf32>, vector<1x16x8xf32> -> vector<4x16x8xf32>
    %42 = vector.shape_cast %41 : vector<4x16x8xf32> to vector<8x8x8xf32>
    %43 = vector.extract_strided_slice %32 {offsets = [0, 32], sizes = [16, 8], strides = [1, 1]} : vector<16x96xf32> to vector<16x8xf32>
    %44 = vector.extract_strided_slice %32 {offsets = [0, 40], sizes = [16, 8], strides = [1, 1]} : vector<16x96xf32> to vector<16x8xf32>
    %45 = vector.extract_strided_slice %32 {offsets = [0, 48], sizes = [16, 8], strides = [1, 1]} : vector<16x96xf32> to vector<16x8xf32>
    %46 = vector.extract_strided_slice %32 {offsets = [0, 56], sizes = [16, 8], strides = [1, 1]} : vector<16x96xf32> to vector<16x8xf32>
    %47 = vector.shape_cast %43 : vector<16x8xf32> to vector<1x16x8xf32>
    %48 = vector.shape_cast %44 : vector<16x8xf32> to vector<1x16x8xf32>
    %49 = vector.shape_cast %45 : vector<16x8xf32> to vector<1x16x8xf32>
    %50 = vector.shape_cast %46 : vector<16x8xf32> to vector<1x16x8xf32>
    %51 = tpu.concatenate %47, %48, %49, %50 in 0 : vector<1x16x8xf32>, vector<1x16x8xf32>, vector<1x16x8xf32>, vector<1x16x8xf32> -> vector<4x16x8xf32>
    %52 = vector.shape_cast %51 : vector<4x16x8xf32> to vector<8x8x8xf32>
    %53 = vector.extract_strided_slice %32 {offsets = [0, 64], sizes = [16, 8], strides = [1, 1]} : vector<16x96xf32> to vector<16x8xf32>
    %54 = vector.extract_strided_slice %32 {offsets = [0, 72], sizes = [16, 8], strides = [1, 1]} : vector<16x96xf32> to vector<16x8xf32>
    %55 = vector.extract_strided_slice %32 {offsets = [0, 80], sizes = [16, 8], strides = [1, 1]} : vector<16x96xf32> to vector<16x8xf32>
    %56 = vector.extract_strided_slice %32 {offsets = [0, 88], sizes = [16, 8], strides = [1, 1]} : vector<16x96xf32> to vector<16x8xf32>
    %57 = vector.shape_cast %53 : vector<16x8xf32> to vector<1x16x8xf32>
    %58 = vector.shape_cast %54 : vector<16x8xf32> to vector<1x16x8xf32>
    %59 = vector.shape_cast %55 : vector<16x8xf32> to vector<1x16x8xf32>
    %60 = vector.shape_cast %56 : vector<16x8xf32> to vector<1x16x8xf32>
    %61 = tpu.concatenate %57, %58, %59, %60 in 0 : vector<1x16x8xf32>, vector<1x16x8xf32>, vector<1x16x8xf32>, vector<1x16x8xf32> -> vector<4x16x8xf32>
    %62 = vector.shape_cast %61 : vector<4x16x8xf32> to vector<8x8x8xf32>
    "tpu.trace_start"() <{level = 10 : i32, message = "gqd,gkd->gqk"}> : () -> ()
    %cst_16 = arith.constant dense<0.000000e+00> : vector<8x8x8xf32>
    %63 = tpu.matmul %42, %52, %cst_16 {dimension_numbers = #tpu.dot_dimension_numbers<[2], [2], [1], [1], [0, 0, 0, 1, 1, 1], [0], [0]>} : vector<8x8x8xf32>, vector<8x8x8xf32>, vector<8x8x8xf32> -> vector<8x8x8xf32>
    "tpu.trace_stop"() : () -> ()
    %cst_17 = arith.constant dense<0xFF800000> : vector<8x8xf32>
    %64 = vector.multi_reduction <maximumf>, %63, %cst_17 [2] : vector<8x8x8xf32> to vector<8x8xf32>
    %65 = vector.shape_cast %64 : vector<8x8xf32> to vector<8x8x1xf32>
    %66 = vector.broadcast %65 : vector<8x8x1xf32> to vector<8x8x8xf32>
    %67 = arith.subf %63, %66 : vector<8x8x8xf32>
    %68 = math.exp %67 : vector<8x8x8xf32>
    %cst_18 = arith.constant dense<0.000000e+00> : vector<8x8xf32>
    %69 = vector.multi_reduction <add>, %68, %cst_18 [2] : vector<8x8x8xf32> to vector<8x8xf32>
    %70 = vector.shape_cast %69 : vector<8x8xf32> to vector<8x8x1xf32>
    %71 = vector.broadcast %70 : vector<8x8x1xf32> to vector<8x8x8xf32>
    %72 = arith.divf %68, %71 : vector<8x8x8xf32>
    "tpu.trace_start"() <{level = 10 : i32, message = "gqk,gkd->gqd"}> : () -> ()
    %cst_19 = arith.constant dense<0.000000e+00> : vector<8x8x8xf32>
    %73 = tpu.matmul %72, %62, %cst_19 {dimension_numbers = #tpu.dot_dimension_numbers<[2], [1], [1], [2], [0, 0, 0, 1, 1, 2], [0], [0]>} : vector<8x8x8xf32>, vector<8x8x8xf32>, vector<8x8x8xf32> -> vector<8x8x8xf32>
    "tpu.trace_stop"() : () -> ()
    %74 = vector.shape_cast %73 : vector<8x8x8xf32> to vector<4x16x8xf32>
    %75 = vector.extract_strided_slice %74 {offsets = [0, 0, 0], sizes = [1, 16, 8], strides = [1, 1, 1]} : vector<4x16x8xf32> to vector<1x16x8xf32>
    %76 = vector.shape_cast %75 : vector<1x16x8xf32> to vector<16x8xf32>
    %c0_20 = arith.constant 0 : index
    %c0_21 = arith.constant 0 : index
    %77 = vector.load %arg14[%c0_20, %c0_21] : memref<16x32xf32, #tpu.memory_space<vmem>>, vector<16x8xf32>
    tpu.vector_store %arg14[%c0_20, %c0_21], %76 {strides = array<i32>} : memref<16x32xf32, #tpu.memory_space<vmem>>, vector<16x8xf32>,
    %78 = vector.extract_strided_slice %74 {offsets = [1, 0, 0], sizes = [1, 16, 8], strides = [1, 1, 1]} : vector<4x16x8xf32> to vector<1x16x8xf32>
    %79 = vector.shape_cast %78 : vector<1x16x8xf32> to vector<16x8xf32>
    %c0_22 = arith.constant 0 : index
    %c8 = arith.constant 8 : index
    %80 = vector.load %arg14[%c0_22, %c8] : memref<16x32xf32, #tpu.memory_space<vmem>>, vector<16x8xf32>
    tpu.vector_store %arg14[%c0_22, %c8], %79 {strides = array<i32>} : memref<16x32xf32, #tpu.memory_space<vmem>>, vector<16x8xf32>,
    %81 = vector.extract_strided_slice %74 {offsets = [2, 0, 0], sizes = [1, 16, 8], strides = [1, 1, 1]} : vector<4x16x8xf32> to vector<1x16x8xf32>
    %82 = vector.shape_cast %81 : vector<1x16x8xf32> to vector<16x8xf32>
    %c0_23 = arith.constant 0 : index
    %c16 = arith.constant 16 : index
    %83 = vector.load %arg14[%c0_23, %c16] : memref<16x32xf32, #tpu.memory_space<vmem>>, vector<16x8xf32>
    tpu.vector_store %arg14[%c0_23, %c16], %82 {strides = array<i32>} : memref<16x32xf32, #tpu.memory_space<vmem>>, vector<16x8xf32>,
    %84 = vector.extract_strided_slice %74 {offsets = [3, 0, 0], sizes = [1, 16, 8], strides = [1, 1, 1]} : vector<4x16x8xf32> to vector<1x16x8xf32>
    %85 = vector.shape_cast %84 : vector<1x16x8xf32> to vector<16x8xf32>
    %c0_24 = arith.constant 0 : index
    %c24 = arith.constant 24 : index
    %86 = vector.load %arg14[%c0_24, %c24] : memref<16x32xf32, #tpu.memory_space<vmem>>, vector<16x8xf32>
    tpu.vector_store %arg14[%c0_24, %c24], %85 {strides = array<i32>} : memref<16x32xf32, #tpu.memory_space<vmem>>, vector<16x8xf32>,
    %c0_25 = arith.constant 0 : index
    %c0_26 = arith.constant 0 : index
    %87 = vector.load %arg14[%c0_25, %c0_26] : memref<16x32xf32, #tpu.memory_space<vmem>>, vector<16x32xf32>
    %c0_27 = arith.constant 0 : index
    %c0_28 = arith.constant 0 : index
    %c0_29 = arith.constant 0 : index
    %88 = vector.load %arg5[%c0_27, %c0_28, %c0_29] : memref<1x32x32xf32, #tpu.memory_space<vmem>>, vector<1x32x32xf32>
    %89 = vector.shape_cast %88 : vector<1x32x32xf32> to vector<32x32xf32>
    %cst_30 = arith.constant dense<0.000000e+00> : vector<16x32xf32>
    %90 = tpu.matmul %87, %89, %cst_30 {dimension_numbers = #tpu.dot_dimension_numbers<[1], [0], [0], [1], [0, 0, 1, 1], [], []>} : vector<16x32xf32>, vector<32x32xf32>, vector<16x32xf32> -> vector<16x32xf32>
    %91 = arith.addf %3, %90 : vector<16x32xf32>
    %c0_31 = arith.constant 0 : index
    %c0_32 = arith.constant 0 : index
    %c0_33 = arith.constant 0 : index
    %92 = vector.load %arg6[%c0_31, %c0_32, %c0_33] : memref<1x1x32xf32, #tpu.memory_space<vmem>>, vector<1x1x32xf32>
    %93 = vector.shape_cast %92 : vector<1x1x32xf32> to vector<1x32xf32>
    %94 = vector.broadcast %93 : vector<1x32xf32> to vector<16x32xf32>
    %95 = arith.addf %91, %94 : vector<16x32xf32>
    %c0_34 = arith.constant 0 : index
    %c0_35 = arith.constant 0 : index
    %c0_36 = arith.constant 0 : index
    %96 = vector.load %arg7[%c0_34, %c0_35, %c0_36] : memref<1x1x32xf32, #tpu.memory_space<vmem>>, vector<1x1x32xf32>
    %97 = vector.shape_cast %96 : vector<1x1x32xf32> to vector<1x32xf32>
    %c0_37 = arith.constant 0 : index
    %c0_38 = arith.constant 0 : index
    %c0_39 = arith.constant 0 : index
    %98 = vector.load %arg8[%c0_37, %c0_38, %c0_39] : memref<1x1x32xf32, #tpu.memory_space<vmem>>, vector<1x1x32xf32>
    %99 = vector.shape_cast %98 : vector<1x1x32xf32> to vector<1x32xf32>
    %cst_40 = arith.constant dense<0.000000e+00> : vector<16xf32>
    %100 = vector.multi_reduction <add>, %95, %cst_40 [1] : vector<16x32xf32> to vector<16xf32>
    %101 = vector.shape_cast %100 : vector<16xf32> to vector<16x1xf32>
    %cst_41 = arith.constant 3.200000e+01 : f32
    %102 = vector.broadcast %cst_41 : f32 to vector<16x1xf32>
    %103 = arith.divf %101, %102 : vector<16x1xf32>
    %104 = vector.broadcast %103 : vector<16x1xf32> to vector<16x32xf32>
    %105 = arith.subf %95, %104 : vector<16x32xf32>
    %106 = arith.mulf %105, %105 : vector<16x32xf32>
    %cst_42 = arith.constant dense<0.000000e+00> : vector<16xf32>
    %107 = vector.multi_reduction <add>, %106, %cst_42 [1] : vector<16x32xf32> to vector<16xf32>
    %108 = vector.shape_cast %107 : vector<16xf32> to vector<16x1xf32>
    %cst_43 = arith.constant 3.200000e+01 : f32
    %109 = vector.broadcast %cst_43 : f32 to vector<16x1xf32>
    %110 = arith.divf %108, %109 : vector<16x1xf32>
    %111 = vector.broadcast %103 : vector<16x1xf32> to vector<16x32xf32>
    %112 = arith.subf %95, %111 : vector<16x32xf32>
    %cst_44 = arith.constant 9.99999974E-6 : f32
    %113 = vector.broadcast %cst_44 : f32 to vector<16x1xf32>
    %114 = arith.addf %110, %113 : vector<16x1xf32>
    %115 = math.rsqrt %114 : vector<16x1xf32>
    %116 = vector.broadcast %115 : vector<16x1xf32> to vector<16x32xf32>
    %117 = arith.mulf %112, %116 : vector<16x32xf32>
    %118 = vector.broadcast %97 : vector<1x32xf32> to vector<16x32xf32>
    %119 = arith.mulf %117, %118 : vector<16x32xf32>
    %120 = vector.broadcast %99 : vector<1x32xf32> to vector<16x32xf32>
    %121 = arith.addf %119, %120 : vector<16x32xf32>
    %c0_45 = arith.constant 0 : index
    %c0_46 = arith.constant 0 : index
    %c0_47 = arith.constant 0 : index
    %122 = vector.load %arg9[%c0_45, %c0_46, %c0_47] : memref<1x32x64xf32, #tpu.memory_space<vmem>>, vector<1x32x64xf32>
    %123 = vector.shape_cast %122 : vector<1x32x64xf32> to vector<32x64xf32>
    %cst_48 = arith.constant dense<0.000000e+00> : vector<16x64xf32>
    %124 = tpu.matmul %121, %123, %cst_48 {dimension_numbers = #tpu.dot_dimension_numbers<[1], [0], [0], [1], [0, 0, 1, 1], [], []>} : vector<16x32xf32>, vector<32x64xf32>, vector<16x64xf32> -> vector<16x64xf32>
    %c0_49 = arith.constant 0 : index
    %c0_50 = arith.constant 0 : index
    %c0_51 = arith.constant 0 : index
    %125 = vector.load %arg10[%c0_49, %c0_50, %c0_51] : memref<1x1x64xf32, #tpu.memory_space<vmem>>, vector<1x1x64xf32>
    %126 = vector.shape_cast %125 : vector<1x1x64xf32> to vector<1x64xf32>
    %127 = vector.broadcast %126 : vector<1x64xf32> to vector<16x64xf32>
    %128 = arith.addf %124, %127 : vector<16x64xf32>
    %cst_52 = arith.constant 5.000000e-01 : f32
    %129 = vector.broadcast %cst_52 : f32 to vector<16x64xf32>
    %130 = arith.mulf %129, %128 : vector<16x64xf32>
    %cst_53 = arith.constant 0.707106769 : f32
    %131 = vector.broadcast %cst_53 : f32 to vector<16x64xf32>
    %132 = arith.mulf %128, %131 : vector<16x64xf32>
    %133 = math.erf %132 : vector<16x64xf32>
    %cst_54 = arith.constant 1.000000e+00 : f32
    %134 = vector.broadcast %cst_54 : f32 to vector<16x64xf32>
    %135 = arith.addf %134, %133 : vector<16x64xf32>
    %136 = arith.mulf %130, %135 : vector<16x64xf32>
    %c0_55 = arith.constant 0 : index
    %c0_56 = arith.constant 0 : index
    %c0_57 = arith.constant 0 : index
    %137 = vector.load %arg11[%c0_55, %c0_56, %c0_57] : memref<1x64x32xf32, #tpu.memory_space<vmem>>, vector<1x64x32xf32>
    %138 = vector.shape_cast %137 : vector<1x64x32xf32> to vector<64x32xf32>
    %cst_58 = arith.constant dense<0.000000e+00> : vector<16x32xf32>
    %139 = tpu.matmul %136, %138, %cst_58 {dimension_numbers = #tpu.dot_dimension_numbers<[1], [0], [0], [1], [0, 0, 1, 1], [], []>} : vector<16x64xf32>, vector<64x32xf32>, vector<16x32xf32> -> vector<16x32xf32>
    %c0_59 = arith.constant 0 : index
    %c0_60 = arith.constant 0 : index
    %c0_61 = arith.constant 0 : index
    %140 = vector.load %arg12[%c0_59, %c0_60, %c0_61] : memref<1x1x32xf32, #tpu.memory_space<vmem>>, vector<1x1x32xf32>
    %141 = vector.shape_cast %140 : vector<1x1x32xf32> to vector<1x32xf32>
    %142 = vector.broadcast %141 : vector<1x32xf32> to vector<16x32xf32>
    %143 = arith.addf %139, %142 : vector<16x32xf32>
    %144 = arith.addf %95, %143 : vector<16x32xf32>
    %c0_62 = arith.constant 0 : index
    %c0_63 = arith.constant 0 : index
    %145 = vector.load %arg13[%c0_62, %c0_63] : memref<16x32xf32, #tpu.memory_space<vmem>>, vector<16x32xf32>
    tpu.vector_store %arg13[%c0_62, %c0_63], %144 {strides = array<i32>} : memref<16x32xf32, #tpu.memory_space<vmem>>, vector<16x32xf32>,
    return
  }
  func.func @transform_0(%arg0: i32) -> (i32, i32) {
    %c0_i32 = arith.constant 0 : i32
    %c0_i32_0 = arith.constant 0 : i32
    %c0_i32_1 = arith.constant 0 : i32
    return %c0_i32, %c0_i32_0 : i32, i32
  }
  func.func @transform_1(%arg0: i32) -> (i32, i32, i32) {
    %c0_i32 = arith.constant 0 : i32
    %c0_i32_0 = arith.constant 0 : i32
    %c0_i32_1 = arith.constant 0 : i32
    return %arg0, %c0_i32, %c0_i32_0 : i32, i32, i32
  }
  func.func @transform_2(%arg0: i32) -> (i32, i32, i32) {
    %c0_i32 = arith.constant 0 : i32
    %c0_i32_0 = arith.constant 0 : i32
    %c0_i32_1 = arith.constant 0 : i32
    return %arg0, %c0_i32, %c0_i32_0 : i32, i32, i32
  }
  func.func @transform_3(%arg0: i32) -> (i32, i32, i32) {
    %c0_i32 = arith.constant 0 : i32
    %c0_i32_0 = arith.constant 0 : i32
    %c0_i32_1 = arith.constant 0 : i32
    return %arg0, %c0_i32, %c0_i32_0 : i32, i32, i32
  }
  func.func @transform_4(%arg0: i32) -> (i32, i32, i32) {
    %c0_i32 = arith.constant 0 : i32
    %c0_i32_0 = arith.constant 0 : i32
    %c0_i32_1 = arith.constant 0 : i32
    return %arg0, %c0_i32, %c0_i32_0 : i32, i32, i32
  }
  func.func @transform_5(%arg0: i32) -> (i32, i32, i32) {
    %c0_i32 = arith.constant 0 : i32
    %c0_i32_0 = arith.constant 0 : i32
    %c0_i32_1 = arith.constant 0 : i32
    return %arg0, %c0_i32, %c0_i32_0 : i32, i32, i32
  }
  func.func @transform_6(%arg0: i32) -> (i32, i32, i32) {
    %c0_i32 = arith.constant 0 : i32
    %c0_i32_0 = arith.constant 0 : i32
    %c0_i32_1 = arith.constant 0 : i32
    return %arg0, %c0_i32, %c0_i32_0 : i32, i32, i32
  }
  func.func @transform_7(%arg0: i32) -> (i32, i32, i32) {
    %c0_i32 = arith.constant 0 : i32
    %c0_i32_0 = arith.constant 0 : i32
    %c0_i32_1 = arith.constant 0 : i32
    return %arg0, %c0_i32, %c0_i32_0 : i32, i32, i32
  }
  func.func @transform_8(%arg0: i32) -> (i32, i32, i32) {
    %c0_i32 = arith.constant 0 : i32
    %c0_i32_0 = arith.constant 0 : i32
    %c0_i32_1 = arith.constant 0 : i32
    return %arg0, %c0_i32, %c0_i32_0 : i32, i32, i32
  }
  func.func @transform_9(%arg0: i32) -> (i32, i32, i32) {
    %c0_i32 = arith.constant 0 : i32
    %c0_i32_0 = arith.constant 0 : i32
    %c0_i32_1 = arith.constant 0 : i32
    return %arg0, %c0_i32, %c0_i32_0 : i32, i32, i32
  }
  func.func @transform_10(%arg0: i32) -> (i32, i32, i32) {
    %c0_i32 = arith.constant 0 : i32
    %c0_i32_0 = arith.constant 0 : i32
    %c0_i32_1 = arith.constant 0 : i32
    return %arg0, %c0_i32, %c0_i32_0 : i32, i32, i32
  }
  func.func @transform_11(%arg0: i32) -> (i32, i32, i32) {
    %c0_i32 = arith.constant 0 : i32
    %c0_i32_0 = arith.constant 0 : i32
    %c0_i32_1 = arith.constant 0 : i32
    return %arg0, %c0_i32, %c0_i32_0 : i32, i32, i32
  }
  func.func @transform_12(%arg0: i32) -> (i32, i32) {
    %c0_i32 = arith.constant 0 : i32
    %c0_i32_0 = arith.constant 0 : i32
    %c0_i32_1 = arith.constant 0 : i32
    return %c0_i32, %c0_i32_0 : i32, i32
  }
}

</mosaic_0001>

<llo_original>
// kernel: _transformer_forward_impl.1
$region0: #{_transformer_forward_impl.1}
  #allocation0 [shape = 'u32[]', space=smem, size = 0x4, offset = 0x4, fixed_abs, tag = 'smem constant byte address 0x4 - core index']
  #allocation1 [shape = 'u32[144,128]{1,0:T(1,128)}', space=vmem, size = 0x12000, scoped, tag = 'internal scratch']
  #allocation2 [shape = 'f32[16,32]{1,0:T(8,128)}', space=vmem, size = 0x2000, scoped, tag = 'scratch operand']
  %s0 = inlined_call_operand.vmem [shape: f32[16,32], index: 0, kind: input, shape index: {}, may-alias: {0,12}]
  %s1 = inlined_call_operand.vmem [shape: f32[2,1,32], index: 1, kind: input, shape index: {}]
  %s2 = inlined_call_operand.vmem [shape: f32[2,1,32], index: 2, kind: input, shape index: {}]
  %s3 = inlined_call_operand.vmem [shape: f32[2,32,96], index: 3, kind: input, shape index: {}]
  %s4 = inlined_call_operand.vmem [shape: f32[2,32,32], index: 4, kind: input, shape index: {}]
  %s5 = inlined_call_operand.vmem [shape: f32[2,1,32], index: 5, kind: input, shape index: {}]
  %s6 = inlined_call_operand.vmem [shape: f32[2,1,32], index: 6, kind: input, shape index: {}]
  %s7 = inlined_call_operand.vmem [shape: f32[2,1,32], index: 7, kind: input, shape index: {}]
  %s8 = inlined_call_operand.hbm [shape: f32[2,32,64], index: 8, kind: input, shape index: {}]
  %s9 = inlined_call_operand.vmem [shape: f32[2,1,64], index: 9, kind: input, shape index: {}]
  %s10 = inlined_call_operand.vmem [shape: f32[2,64,32], index: 10, kind: input, shape index: {}]
  %s11 = inlined_call_operand.vmem [shape: f32[2,1,32], index: 11, kind: input, shape index: {}]
  %s12 = inlined_call_operand.vmem [shape: f32[16,32], index: 12, kind: output, shape index: {}, may-alias: {0,12}]
  %s13 = sld [smem:[#allocation0]]
  $region89: #{_transformer_forward_impl.1} parent=0
    _
  %s15 = ssub.s32 1, %s13
  %s16 = scalar_select 0, %s15, %s13
  $region1: #{_transformer_forward_impl.1} parent=0
    #allocation3 [shape = 'u8[32768]{0}', space=vmem, size = 0x8000, scoped, tag = 'input window, operand 8']
    #allocation4 [shape = 's32[2]{0}', space=sflag, size = 0x8, scoped, tag = 'scoped memory for _transformer_forward_impl.1']
    %17 = vsyncpa [#allocation4], 0
    %s18 = scalar_lea.sflag [#allocation4], 1
    %19 = vsyncpa %s18, 0
    loop: start=0, step=1, limit=4
    $region2: #{_transformer_forward_impl.1} parent=1 // loop_pre_header
      _
    $region3: #{_transformer_forward_impl.1} parent=1 // loop_header
      %s21 = sphi 0, %s25
      %p22 = scmp.ge.s32.totalorder %s21, 4
      %s29 = sphi 0, %s29
      %s31 = sphi 0, %s29
      %s32 = sphi 0, %s31
      %s46 = sphi 0, %s32
      %s52 = sphi 0, %s54
      %s55 = sphi 0, %s52
      %s56 = sphi 0, %s55
      %s72 = sphi 0, %s56
      %s78 = sphi 0, %s80
      %s81 = sphi 0, %s78
      %s82 = sphi 0, %s81
      %s98 = sphi 0, %s82
      %s104 = sphi 0, %s106
      %s107 = sphi 0, %s104
      %s108 = sphi 0, %s107
      %s124 = sphi 0, %s108
      %s130 = sphi 0, %s132
      %s133 = sphi 0, %s130
      %s134 = sphi 0, %s133
      %s150 = sphi 0, %s134
      %s156 = sphi 0, %s158
      %s159 = sphi 0, %s156
      %s160 = sphi 0, %s159
      %s176 = sphi 0, %s160
      %s182 = sphi 0, %s184
      %s185 = sphi 0, %s182
      %s186 = sphi 0, %s185
      %s202 = sphi 0, %s186
      %s208 = sphi 0, %s210
      %s211 = sphi 0, %s208
      %s212 = sphi 0, %s211
      %s228 = sphi 0, %s212
      %s234 = sphi 0, %s236
      %s237 = sphi 0, %s234
      %s238 = sphi 0, %s237
      %s254 = sphi 0, %s238
      %s260 = sphi 0, %s262
      %s263 = sphi 0, %s260
      %s264 = sphi 0, %s263
      %s280 = sphi 0, %s264
      %s286 = sphi 0, %s288
      %s289 = sphi 0, %s286
      %s290 = sphi 0, %s289
      %s306 = sphi 0, %s290
      %s312 = sphi 0, %s314
      %s315 = sphi 0, %s312
      %s316 = sphi 0, %s315
      %s332 = sphi 0, %s316
      %s336 = sphi 0, %s336
      %s338 = sphi 0, %s336
      %s339 = sphi 0, %s338
      %s353 = sphi 0, %s339
    $region4: #{_transformer_forward_impl.1} parent=1 // loop_header_branch
      %24 = sbr.rel (%p22) target = $region8
    $region5: #{_transformer_forward_impl.1} parent=1 // loop_body
      %s26 = ssub.s32 %s21, 1
      %s27 = ssub.s32 %s21, 2
      %s28 = sadd.s32 %s21, 1
      %s30 = sadd.s32 %s29, 1
      %p33 = scmp.eq.s32.totalorder %s21, 1
      %p34 = scmp.ne.s32.totalorder %s29, %s31
      %p35 = scmp.eq.s32.totalorder %s21, 0
      %p36 = por %p34, %p35
      %p37 = scmp.ne.s32.totalorder %s29, %s31
      %p38 = scmp.eq.s32.totalorder %s26, 1
      %p39 = por %p37, %p38
      %p40 = scmp.ne.s32.totalorder %s31, %s32
      %p41 = scmp.eq.s32.totalorder %s26, 0
      %p42 = por %p40, %p41
      %p43 = scmp.ne.s32.totalorder %s31, %s32
      %p44 = scmp.eq.s32.totalorder %s27, 1
      %p45 = por %p43, %p44
      %p47 = scmp.ne.s32.totalorder %s32, %s46
      %p48 = scmp.eq.s32.totalorder %s27, 0
      %p49 = por %p47, %p48
      %s50 = ssub.s32 %s21, %s28
      %p51 = scmp.eq.s32.totalorder %s50, 0
      %s53 = sadd.s32 %s52, 1
      %s54 = scalar_select %p51, %s52, %s53
      %p57 = pneg %p51
      %p58 = scmp.eq.s32.totalorder %s21, 1
      %p59 = por %p57, %p58
      %p60 = scmp.ne.s32.totalorder %s52, %s55
      %p61 = scmp.eq.s32.totalorder %s21, 0
      %p62 = por %p60, %p61
      %p63 = scmp.ne.s32.totalorder %s52, %s55
      %p64 = scmp.eq.s32.totalorder %s26, 1
      %p65 = por %p63, %p64
      %p66 = scmp.ne.s32.totalorder %s55, %s56
      %p67 = scmp.eq.s32.totalorder %s26, 0
      %p68 = por %p66, %p67
      %p69 = scmp.ne.s32.totalorder %s55, %s56
      %p70 = scmp.eq.s32.totalorder %s27, 1
      %p71 = por %p69, %p70
      %p73 = scmp.ne.s32.totalorder %s56, %s72
      %p74 = scmp.eq.s32.totalorder %s27, 0
      %p75 = por %p73, %p74
      %s76 = ssub.s32 %s21, %s28
      %p77 = scmp.eq.s32.totalorder %s76, 0
      %s79 = sadd.s32 %s78, 1
      %s80 = scalar_select %p77, %s78, %s79
      %p83 = pneg %p77
      %p84 = scmp.eq.s32.totalorder %s21, 1
      %p85 = por %p83, %p84
      %p86 = scmp.ne.s32.totalorder %s78, %s81
      %p87 = scmp.eq.s32.totalorder %s21, 0
      %p88 = por %p86, %p87
      %p89 = scmp.ne.s32.totalorder %s78, %s81
      %p90 = scmp.eq.s32.totalorder %s26, 1
      %p91 = por %p89, %p90
      %p92 = scmp.ne.s32.totalorder %s81, %s82
      %p93 = scmp.eq.s32.totalorder %s26, 0
      %p94 = por %p92, %p93
      %p95 = scmp.ne.s32.totalorder %s81, %s82
      %p96 = scmp.eq.s32.totalorder %s27, 1
      %p97 = por %p95, %p96
      %p99 = scmp.ne.s32.totalorder %s82, %s98
      %p100 = scmp.eq.s32.totalorder %s27, 0
      %p101 = por %p99, %p100
      %s102 = ssub.s32 %s21, %s28
      %p103 = scmp.eq.s32.totalorder %s102, 0
      %s105 = sadd.s32 %s104, 1
      %s106 = scalar_select %p103, %s104, %s105
      %p109 = pneg %p103
      %p110 = scmp.eq.s32.totalorder %s21, 1
      %p111 = por %p109, %p110
      %p112 = scmp.ne.s32.totalorder %s104, %s107
      %p113 = scmp.eq.s32.totalorder %s21, 0
      %p114 = por %p112, %p113
      %p115 = scmp.ne.s32.totalorder %s104, %s107
      %p116 = scmp.eq.s32.totalorder %s26, 1
      %p117 = por %p115, %p116
      %p118 = scmp.ne.s32.totalorder %s107, %s108
      %p119 = scmp.eq.s32.totalorder %s26, 0
      %p120 = por %p118, %p119
      %p121 = scmp.ne.s32.totalorder %s107, %s108
      %p122 = scmp.eq.s32.totalorder %s27, 1
      %p123 = por %p121, %p122
      %p125 = scmp.ne.s32.totalorder %s108, %s124
      %p126 = scmp.eq.s32.totalorder %s27, 0
      %p127 = por %p125, %p126
      %s128 = ssub.s32 %s21, %s28
      %p129 = scmp.eq.s32.totalorder %s128, 0
      %s131 = sadd.s32 %s130, 1
      %s132 = scalar_select %p129, %s130, %s131
      %p135 = pneg %p129
      %p136 = scmp.eq.s32.totalorder %s21, 1
      %p137 = por %p135, %p136
      %p138 = scmp.ne.s32.totalorder %s130, %s133
      %p139 = scmp.eq.s32.totalorder %s21, 0
      %p140 = por %p138, %p139
      %p141 = scmp.ne.s32.totalorder %s130, %s133
      %p142 = scmp.eq.s32.totalorder %s26, 1
      %p143 = por %p141, %p142
      %p144 = scmp.ne.s32.totalorder %s133, %s134
      %p145 = scmp.eq.s32.totalorder %s26, 0
      %p146 = por %p144, %p145
      %p147 = scmp.ne.s32.totalorder %s133, %s134
      %p148 = scmp.eq.s32.totalorder %s27, 1
      %p149 = por %p147, %p148
      %p151 = scmp.ne.s32.totalorder %s134, %s150
      %p152 = scmp.eq.s32.totalorder %s27, 0
      %p153 = por %p151, %p152
      %s154 = ssub.s32 %s21, %s28
      %p155 = scmp.eq.s32.totalorder %s154, 0
      %s157 = sadd.s32 %s156, 1
      %s158 = scalar_select %p155, %s156, %s157
      %p161 = pneg %p155
      %p162 = scmp.eq.s32.totalorder %s21, 1
      %p163 = por %p161, %p162
      %p164 = scmp.ne.s32.totalorder %s156, %s159
      %p165 = scmp.eq.s32.totalorder %s21, 0
      %p166 = por %p164, %p165
      %p167 = scmp.ne.s32.totalorder %s156, %s159
      %p168 = scmp.eq.s32.totalorder %s26, 1
      %p169 = por %p167, %p168
      %p170 = scmp.ne.s32.totalorder %s159, %s160
      %p171 = scmp.eq.s32.totalorder %s26, 0
      %p172 = por %p170, %p171
      %p173 = scmp.ne.s32.totalorder %s159, %s160
      %p174 = scmp.eq.s32.totalorder %s27, 1
      %p175 = por %p173, %p174
      %p177 = scmp.ne.s32.totalorder %s160, %s176
      %p178 = scmp.eq.s32.totalorder %s27, 0
      %p179 = por %p177, %p178
      %s180 = ssub.s32 %s21, %s28
      %p181 = scmp.eq.s32.totalorder %s180, 0
      %s183 = sadd.s32 %s182, 1
      %s184 = scalar_select %p181, %s182, %s183
      %p187 = pneg %p181
      %p188 = scmp.eq.s32.totalorder %s21, 1
      %p189 = por %p187, %p188
      %p190 = scmp.ne.s32.totalorder %s182, %s185
      %p191 = scmp.eq.s32.totalorder %s21, 0
      %p192 = por %p190, %p191
      %p193 = scmp.ne.s32.totalorder %s182, %s185
      %p194 = scmp.eq.s32.totalorder %s26, 1
      %p195 = por %p193, %p194
      %p196 = scmp.ne.s32.totalorder %s185, %s186
      %p197 = scmp.eq.s32.totalorder %s26, 0
      %p198 = por %p196, %p197
      %p199 = scmp.ne.s32.totalorder %s185, %s186
      %p200 = scmp.eq.s32.totalorder %s27, 1
      %p201 = por %p199, %p200
      %p203 = scmp.ne.s32.totalorder %s186, %s202
      %p204 = scmp.eq.s32.totalorder %s27, 0
      %p205 = por %p203, %p204
      %s206 = ssub.s32 %s21, %s28
      %p207 = scmp.eq.s32.totalorder %s206, 0
      %s209 = sadd.s32 %s208, 1
      %s210 = scalar_select %p207, %s208, %s209
      %p213 = pneg %p207
      %p214 = scmp.eq.s32.totalorder %s21, 1
      %p215 = por %p213, %p214
      %p216 = scmp.ne.s32.totalorder %s208, %s211
      %p217 = scmp.eq.s32.totalorder %s21, 0
      %p218 = por %p216, %p217
      %p219 = scmp.ne.s32.totalorder %s208, %s211
      %p220 = scmp.eq.s32.totalorder %s26, 1
      %p221 = por %p219, %p220
      %p222 = scmp.ne.s32.totalorder %s211, %s212
      %p223 = scmp.eq.s32.totalorder %s26, 0
      %p224 = por %p222, %p223
      %p225 = scmp.ne.s32.totalorder %s211, %s212
      %p226 = scmp.eq.s32.totalorder %s27, 1
      %p227 = por %p225, %p226
      %p229 = scmp.ne.s32.totalorder %s212, %s228
      %p230 = scmp.eq.s32.totalorder %s27, 0
      %p231 = por %p229, %p230
      %s232 = ssub.s32 %s21, %s28
      %p233 = scmp.eq.s32.totalorder %s232, 0
      %s235 = sadd.s32 %s234, 1
      %s236 = scalar_select %p233, %s234, %s235
      %p239 = pneg %p233
      %p240 = scmp.eq.s32.totalorder %s21, 1
      %p241 = por %p239, %p240
      %p242 = scmp.ne.s32.totalorder %s234, %s237
      %p243 = scmp.eq.s32.totalorder %s21, 0
      %p244 = por %p242, %p243
      %p245 = scmp.ne.s32.totalorder %s234, %s237
      %p246 = scmp.eq.s32.totalorder %s26, 1
      %p247 = por %p245, %p246
      %p248 = scmp.ne.s32.totalorder %s237, %s238
      %p249 = scmp.eq.s32.totalorder %s26, 0
      %p250 = por %p248, %p249
      %p251 = scmp.ne.s32.totalorder %s237, %s238
      %p252 = scmp.eq.s32.totalorder %s27, 1
      %p253 = por %p251, %p252
      %p255 = scmp.ne.s32.totalorder %s238, %s254
      %p256 = scmp.eq.s32.totalorder %s27, 0
      %p257 = por %p255, %p256
      %s258 = ssub.s32 %s21, %s28
      %p259 = scmp.eq.s32.totalorder %s258, 0
      %s261 = sadd.s32 %s260, 1
      %s262 = scalar_select %p259, %s260, %s261
      %p265 = pneg %p259
      %p266 = scmp.eq.s32.totalorder %s21, 1
      %p267 = por %p265, %p266
      %p268 = scmp.ne.s32.totalorder %s260, %s263
      %p269 = scmp.eq.s32.totalorder %s21, 0
      %p270 = por %p268, %p269
      %p271 = scmp.ne.s32.totalorder %s260, %s263
      %p272 = scmp.eq.s32.totalorder %s26, 1
      %p273 = por %p271, %p272
      %p274 = scmp.ne.s32.totalorder %s263, %s264
      %p275 = scmp.eq.s32.totalorder %s26, 0
      %p276 = por %p274, %p275
      %p277 = scmp.ne.s32.totalorder %s263, %s264
      %p278 = scmp.eq.s32.totalorder %s27, 1
      %p279 = por %p277, %p278
      %p281 = scmp.ne.s32.totalorder %s264, %s280
      %p282 = scmp.eq.s32.totalorder %s27, 0
      %p283 = por %p281, %p282
      %s284 = ssub.s32 %s21, %s28
      %p285 = scmp.eq.s32.totalorder %s284, 0
      %s287 = sadd.s32 %s286, 1
      %s288 = scalar_select %p285, %s286, %s287
      %p291 = pneg %p285
      %p292 = scmp.eq.s32.totalorder %s21, 1
      %p293 = por %p291, %p292
      %p294 = scmp.ne.s32.totalorder %s286, %s289
      %p295 = scmp.eq.s32.totalorder %s21, 0
      %p296 = por %p294, %p295
      %p297 = scmp.ne.s32.totalorder %s286, %s289
      %p298 = scmp.eq.s32.totalorder %s26, 1
      %p299 = por %p297, %p298
      %p300 = scmp.ne.s32.totalorder %s289, %s290
      %p301 = scmp.eq.s32.totalorder %s26, 0
      %p302 = por %p300, %p301
      %p303 = scmp.ne.s32.totalorder %s289, %s290
      %p304 = scmp.eq.s32.totalorder %s27, 1
      %p305 = por %p303, %p304
      %p307 = scmp.ne.s32.totalorder %s290, %s306
      %p308 = scmp.eq.s32.totalorder %s27, 0
      %p309 = por %p307, %p308
      %s310 = ssub.s32 %s21, %s28
      %p311 = scmp.eq.s32.totalorder %s310, 0
      %s313 = sadd.s32 %s312, 1
      %s314 = scalar_select %p311, %s312, %s313
      %p317 = pneg %p311
      %p318 = scmp.eq.s32.totalorder %s21, 1
      %p319 = por %p317, %p318
      %p320 = scmp.ne.s32.totalorder %s312, %s315
      %p321 = scmp.eq.s32.totalorder %s21, 0
      %p322 = por %p320, %p321
      %p323 = scmp.ne.s32.totalorder %s312, %s315
      %p324 = scmp.eq.s32.totalorder %s26, 1
      %p325 = por %p323, %p324
      %p326 = scmp.ne.s32.totalorder %s315, %s316
      %p327 = scmp.eq.s32.totalorder %s26, 0
      %p328 = por %p326, %p327
      %p329 = scmp.ne.s32.totalorder %s315, %s316
      %p330 = scmp.eq.s32.totalorder %s27, 1
      %p331 = por %p329, %p330
      %p333 = scmp.ne.s32.totalorder %s316, %s332
      %p334 = scmp.eq.s32.totalorder %s27, 0
      %p335 = por %p333, %p334
      %s337 = sadd.s32 %s336, 1
      %p340 = scmp.eq.s32.totalorder %s21, 1
      %p341 = scmp.ne.s32.totalorder %s336, %s338
      %p342 = scmp.eq.s32.totalorder %s21, 0
      %p343 = por %p341, %p342
      %p344 = scmp.ne.s32.totalorder %s336, %s338
      %p345 = scmp.eq.s32.totalorder %s26, 1
      %p346 = por %p344, %p345
      %p347 = scmp.ne.s32.totalorder %s338, %s339
      %p348 = scmp.eq.s32.totalorder %s26, 0
      %p349 = por %p347, %p348
      %p350 = scmp.ne.s32.totalorder %s338, %s339
      %p351 = scmp.eq.s32.totalorder %s27, 1
      %p352 = por %p350, %p351
      %p354 = scmp.ne.s32.totalorder %s339, %s353
      %p355 = scmp.eq.s32.totalorder %s27, 0
      %p356 = por %p354, %p355
      %p357 = scmp.le.s32.totalorder 1, %s21
      %p358 = scmp.lt.s32.totalorder %s21, 3
      %p359 = pnand %p357, %p358
      %p360 = pneg %p359
      // Predicated region
      $region9: #{_transformer_forward_impl.1} parent=5 // pred_check
        _
      $region10: #{_transformer_forward_impl.1} parent=5 // pred_check_branch
        %362 = sbr.rel (%p359) target = $region12
      $region11: #{_transformer_forward_impl.1} parent=5 // pred_region
        %s363 = ssub.s32 %s21, 1
        // Predicated region
        $region13: #{_transformer_forward_impl.1} parent=11 // pred_check
          %p364 = pneg %p42
        $region14: #{_transformer_forward_impl.1} parent=11 // pred_check_branch
          %366 = sbr.rel (%p364) target = $region16
        $region15: #{_transformer_forward_impl.1} parent=11 // pred_region
          _
        $region16: #{_transformer_forward_impl.1} parent=11 // pred_fallthru
          _
      $region12: #{_transformer_forward_impl.1} parent=5 // pred_fallthru
        _
      %p367 = scmp.lt.s32.totalorder %s21, 2
      // Predicated region
      $region17: #{_transformer_forward_impl.1} parent=5 // pred_check
        %p368 = pneg %p367
      $region18: #{_transformer_forward_impl.1} parent=5 // pred_check_branch
        %370 = sbr.rel (%p368) target = $region20
      $region19: #{_transformer_forward_impl.1} parent=5 // pred_region
        // Predicated region
        $region21: #{_transformer_forward_impl.1} parent=19 // pred_check
          %p371 = pneg %p62
        $region22: #{_transformer_forward_impl.1} parent=19 // pred_check_branch
          %373 = sbr.rel (%p371) target = $region24
        $region23: #{_transformer_forward_impl.1} parent=19 // pred_region
          %p374 = scmp.lt.s32.totalorder %s21, 1
          %s375 = scalar_select %p374, %s21, 1
          %s376 = scalar_lea.vmem %s1, %s375
        $region24: #{_transformer_forward_impl.1} parent=19 // pred_fallthru
          _
        // Predicated region
        $region25: #{_transformer_forward_impl.1} parent=19 // pred_check
          %p377 = pneg %p88
        $region26: #{_transformer_forward_impl.1} parent=19 // pred_check_branch
          %379 = sbr.rel (%p377) target = $region28
        $region27: #{_transformer_forward_impl.1} parent=19 // pred_region
          %p380 = scmp.lt.s32.totalorder %s21, 1
          %s381 = scalar_select %p380, %s21, 1
          %s382 = scalar_lea.vmem %s2, %s381
        $region28: #{_transformer_forward_impl.1} parent=19 // pred_fallthru
          _
        // Predicated region
        $region29: #{_transformer_forward_impl.1} parent=19 // pred_check
          %p383 = pneg %p114
        $region30: #{_transformer_forward_impl.1} parent=19 // pred_check_branch
          %385 = sbr.rel (%p383) target = $region32
        $region31: #{_transformer_forward_impl.1} parent=19 // pred_region
          %p386 = scmp.lt.s32.totalorder %s21, 1
          %s387 = scalar_select %p386, %s21, 1
          %s388 = smul.addr %s387, 4
          %s389 = smul.addr %s388, 8
          %s390 = scalar_lea.vmem %s3, %s389
        $region32: #{_transformer_forward_impl.1} parent=19 // pred_fallthru
          _
        // Predicated region
        $region33: #{_transformer_forward_impl.1} parent=19 // pred_check
          %p391 = pneg %p140
        $region34: #{_transformer_forward_impl.1} parent=19 // pred_check_branch
          %393 = sbr.rel (%p391) target = $region36
        $region35: #{_transformer_forward_impl.1} parent=19 // pred_region
          %p394 = scmp.lt.s32.totalorder %s21, 1
          %s395 = scalar_select %p394, %s21, 1
          %s396 = smul.addr %s395, 4
          %s397 = smul.addr %s396, 8
          %s398 = scalar_lea.vmem %s4, %s397
        $region36: #{_transformer_forward_impl.1} parent=19 // pred_fallthru
          _
        // Predicated region
        $region37: #{_transformer_forward_impl.1} parent=19 // pred_check
          %p399 = pneg %p166
        $region38: #{_transformer_forward_impl.1} parent=19 // pred_check_branch
          %401 = sbr.rel (%p399) target = $region40
        $region39: #{_transformer_forward_impl.1} parent=19 // pred_region
          %p402 = scmp.lt.s32.totalorder %s21, 1
          %s403 = scalar_select %p402, %s21, 1
          %s404 = scalar_lea.vmem %s5, %s403
        $region40: #{_transformer_forward_impl.1} parent=19 // pred_fallthru
          _
        // Predicated region
        $region41: #{_transformer_forward_impl.1} parent=19 // pred_check
          %p405 = pneg %p192
        $region42: #{_transformer_forward_impl.1} parent=19 // pred_check_branch
          %407 = sbr.rel (%p405) target = $region44
        $region43: #{_transformer_forward_impl.1} parent=19 // pred_region
          %p408 = scmp.lt.s32.totalorder %s21, 1
          %s409 = scalar_select %p408, %s21, 1
          %s410 = scalar_lea.vmem %s6, %s409
        $region44: #{_transformer_forward_impl.1} parent=19 // pred_fallthru
          _
        // Predicated region
        $region45: #{_transformer_forward_impl.1} parent=19 // pred_check
          %p411 = pneg %p218
        $region46: #{_transformer_forward_impl.1} parent=19 // pred_check_branch
          %413 = sbr.rel (%p411) target = $region48
        $region47: #{_transformer_forward_impl.1} parent=19 // pred_region
          %p414 = scmp.lt.s32.totalorder %s21, 1
          %s415 = scalar_select %p414, %s21, 1
          %s416 = scalar_lea.vmem %s7, %s415
        $region48: #{_transformer_forward_impl.1} parent=19 // pred_fallthru
          _
        // Predicated region
        $region49: #{_transformer_forward_impl.1} parent=19 // pred_check
          %p417 = pneg %p244
        $region50: #{_transformer_forward_impl.1} parent=19 // pred_check_branch
          %419 = sbr.rel (%p417) target = $region52
        $region51: #{_transformer_forward_impl.1} parent=19 // pred_region
          %s420 = sand.u32 %s234, 1
          %s421 = scalar_lea.sflag [#allocation4], %s420
          %s422 = sand.u32 %s234, 1
          %s423 = smul.addr %s422, 32
          %s424 = scalar_lea.vmem [#allocation3], %s423
          %s426 = ssub.s32 512, 512
          %427 = vsyncadd %s421, %s426
          %s428 = smul.addr %s21, 4
          %s429 = smul.addr %s428, 128
          %s430 = scalar_lea.hbm %s8, %s429
          %s431 = sshll.u32 %s424, 4
          %s432 = int_to_ptr.vmem [resolvable:$true] %s431
          %437 = dma.hbm_to_vmem [thread:$0]  %s430, 512, %s432, %s421, 128, 128, 8
        $region52: #{_transformer_forward_impl.1} parent=19 // pred_fallthru
          _
        // Predicated region
        $region53: #{_transformer_forward_impl.1} parent=19 // pred_check
          %p438 = pneg %p270
        $region54: #{_transformer_forward_impl.1} parent=19 // pred_check_branch
          %440 = sbr.rel (%p438) target = $region56
        $region55: #{_transformer_forward_impl.1} parent=19 // pred_region
          %p441 = scmp.lt.s32.totalorder %s21, 1
          %s442 = scalar_select %p441, %s21, 1
          %s443 = scalar_lea.vmem %s9, %s442
        $region56: #{_transformer_forward_impl.1} parent=19 // pred_fallthru
          _
        // Predicated region
        $region57: #{_transformer_forward_impl.1} parent=19 // pred_check
          %p444 = pneg %p296
        $region58: #{_transformer_forward_impl.1} parent=19 // pred_check_branch
          %446 = sbr.rel (%p444) target = $region60
        $region59: #{_transformer_forward_impl.1} parent=19 // pred_region
          %p447 = scmp.lt.s32.totalorder %s21, 1
          %s448 = scalar_select %p447, %s21, 1
          %s449 = smul.addr %s448, 8
          %s450 = smul.addr %s449, 8
          %s451 = scalar_lea.vmem %s10, %s450
        $region60: #{_transformer_forward_impl.1} parent=19 // pred_fallthru
          _
        // Predicated region
        $region61: #{_transformer_forward_impl.1} parent=19 // pred_check
          %p452 = pneg %p322
        $region62: #{_transformer_forward_impl.1} parent=19 // pred_check_branch
          %454 = sbr.rel (%p452) target = $region64
        $region63: #{_transformer_forward_impl.1} parent=19 // pred_region
          %p455 = scmp.lt.s32.totalorder %s21, 1
          %s456 = scalar_select %p455, %s21, 1
          %s457 = scalar_lea.vmem %s11, %s456
        $region64: #{_transformer_forward_impl.1} parent=19 // pred_fallthru
          _
      $region20: #{_transformer_forward_impl.1} parent=5 // pred_fallthru
        _
      %p458 = scmp.le.s32.totalorder 1, %s21
      %p459 = scmp.lt.s32.totalorder %s21, 3
      %p460 = pnand %p458, %p459
      %p461 = pneg %p460
      // Predicated region
      $region65: #{_transformer_forward_impl.1} parent=5 // pred_check
        _
      $region66: #{_transformer_forward_impl.1} parent=5 // pred_check_branch
        %463 = sbr.rel (%p460) target = $region68
      $region67: #{_transformer_forward_impl.1} parent=5 // pred_region
        %s464 = ssub.s32 %s21, 1
        %s465 = sand.u32 %s237, 1
        %s466 = scalar_lea.sflag [#allocation4], %s465
        %s467 = sand.u32 %s237, 1
        %s468 = smul.addr %s467, 32
        %s469 = scalar_lea.vmem [#allocation3], %s468
        // Predicated region
        $region69: #{_transformer_forward_impl.1} parent=67 // pred_check
          %p470 = pneg %p250
        $region70: #{_transformer_forward_impl.1} parent=67 // pred_check_branch
          %472 = sbr.rel (%p470) target = $region72
        $region71: #{_transformer_forward_impl.1} parent=67 // pred_region
          %473 = dma.done %s466, 512
        $region72: #{_transformer_forward_impl.1} parent=67 // pred_fallthru
          _
        %p474 = pneg %p42
        %p475 = pneg %p39
        %p476 = scmp.lt.s32.totalorder %s26, 1
        %s477 = scalar_select %p476, %s26, 1
        %s478 = scalar_lea.vmem %s1, %s477
        %p479 = pneg %p68
        %p480 = pneg %p65
        %p481 = scmp.lt.s32.totalorder %s26, 1
        %s482 = scalar_select %p481, %s26, 1
        %s483 = scalar_lea.vmem %s2, %s482
        %p484 = pneg %p94
        %p485 = pneg %p91
        %p486 = scmp.lt.s32.totalorder %s26, 1
        %s487 = scalar_select %p486, %s26, 1
        %s488 = smul.addr %s487, 4
        %s489 = smul.addr %s488, 8
        %s490 = scalar_lea.vmem %s3, %s489
        %p491 = pneg %p120
        %p492 = pneg %p117
        %p493 = scmp.lt.s32.totalorder %s26, 1
        %s494 = scalar_select %p493, %s26, 1
        %s495 = smul.addr %s494, 4
        %s496 = smul.addr %s495, 8
        %s497 = scalar_lea.vmem %s4, %s496
        %p498 = pneg %p146
        %p499 = pneg %p143
        %p500 = scmp.lt.s32.totalorder %s26, 1
        %s501 = scalar_select %p500, %s26, 1
        %s502 = scalar_lea.vmem %s5, %s501
        %p503 = pneg %p172
        %p504 = pneg %p169
        %p505 = scmp.lt.s32.totalorder %s26, 1
        %s506 = scalar_select %p505, %s26, 1
        %s507 = scalar_lea.vmem %s6, %s506
        %p508 = pneg %p198
        %p509 = pneg %p195
        %p510 = scmp.lt.s32.totalorder %s26, 1
        %s511 = scalar_select %p510, %s26, 1
        %s512 = scalar_lea.vmem %s7, %s511
        %p513 = pneg %p224
        %p514 = pneg %p221
        %s515 = sand.u32 %s237, 1
        %s516 = scalar_lea.sflag [#allocation4], %s515
        %s517 = sand.u32 %s237, 1
        %s518 = smul.addr %s517, 32
        %s519 = scalar_lea.vmem [#allocation3], %s518
        %p520 = pneg %p250
        %p521 = pneg %p247
        %p522 = scmp.lt.s32.totalorder %s26, 1
        %s523 = scalar_select %p522, %s26, 1
        %s524 = scalar_lea.vmem %s9, %s523
        %p525 = pneg %p276
        %p526 = pneg %p273
        %p527 = scmp.lt.s32.totalorder %s26, 1
        %s528 = scalar_select %p527, %s26, 1
        %s529 = smul.addr %s528, 8
        %s530 = smul.addr %s529, 8
        %s531 = scalar_lea.vmem %s10, %s530
        %p532 = pneg %p302
        %p533 = pneg %p299
        %p534 = scmp.lt.s32.totalorder %s26, 1
        %s535 = scalar_select %p534, %s26, 1
        %s536 = scalar_lea.vmem %s11, %s535
        %p537 = pneg %p328
        %p538 = pneg %p325
        %p539 = pneg %p349
        %p540 = pneg %p346
        %p541 = scmp.lt.s32.totalorder %s26, 1
        %s542 = scalar_select %p541, %s26, 1
        %s543 = scalar_lea.vmem %s1, %s542
        %p544 = scmp.lt.s32.totalorder %s26, 1
        %s545 = scalar_select %p544, %s26, 1
        %s546 = scalar_lea.vmem %s2, %s545
        %p547 = scmp.lt.s32.totalorder %s26, 1
        %s548 = scalar_select %p547, %s26, 1
        %s549 = smul.addr %s548, 4
        %s550 = smul.addr %s549, 8
        %s551 = scalar_lea.vmem %s3, %s550
        %p552 = scmp.lt.s32.totalorder %s26, 1
        %s553 = scalar_select %p552, %s26, 1
        %s554 = smul.addr %s553, 4
        %s555 = smul.addr %s554, 8
        %s556 = scalar_lea.vmem %s4, %s555
        %p557 = scmp.lt.s32.totalorder %s26, 1
        %s558 = scalar_select %p557, %s26, 1
        %s559 = scalar_lea.vmem %s5, %s558
        %p560 = scmp.lt.s32.totalorder %s26, 1
        %s561 = scalar_select %p560, %s26, 1
        %s562 = scalar_lea.vmem %s6, %s561
        %p563 = scmp.lt.s32.totalorder %s26, 1
        %s564 = scalar_select %p563, %s26, 1
        %s565 = scalar_lea.vmem %s7, %s564
        %p566 = scmp.lt.s32.totalorder %s26, 1
        %s567 = scalar_select %p566, %s26, 1
        %s568 = scalar_lea.vmem %s9, %s567
        %p569 = scmp.lt.s32.totalorder %s26, 1
        %s570 = scalar_select %p569, %s26, 1
        %s571 = smul.addr %s570, 8
        %s572 = smul.addr %s571, 8
        %s573 = scalar_lea.vmem %s10, %s572
        %p574 = scmp.lt.s32.totalorder %s26, 1
        %s575 = scalar_select %p574, %s26, 1
        %s576 = scalar_lea.vmem %s11, %s575
        %p577 = scmp.eq.s32.totalorder %s26, 0
        // Predicated region
        $region73: #{_transformer_forward_impl.1} parent=67 // pred_check
          %p578 = pneg %p577
        $region74: #{_transformer_forward_impl.1} parent=67 // pred_check_branch
          %580 = sbr.rel (%p578) target = $region76
        $region75: #{_transformer_forward_impl.1} parent=67 // pred_region
          %v581 = vld [vmem:[%s0] sm:$0xff]
          %v582 = vld [vmem:[%s0 + $0x8] sm:$0xff]
          %vm583 = vcmask 261120
          %584 = vst.msk [vmem:[%s12] sm:$0xff] %vm583, %v581
          %585 = vst.msk [vmem:[%s12 + $0x8] sm:$0xff] %vm583, %v582
        $region76: #{_transformer_forward_impl.1} parent=67 // pred_fallthru
          _
        %v586 = vld [vmem:[%s12] sm:$0xff]
        %v587 = vld [vmem:[%s12 + $0x8] sm:$0xff]
        %v588 = vld [vmem:[%s543] sm:$0x1]
        %v589 = vld [vmem:[%s546] sm:$0x1]
        %vm590 = vcmask 261120
        %v591 = vsel %vm590, %v586, 0.0
        %592 = vadd.xlane.f32.xlu0 %v591
        %v593 = vpop.xlane.xlu0 %592
        %v594 = vsel %vm590, %v587, 0.0
        %595 = vadd.xlane.f32.xlu0 %v594
        %v596 = vpop.xlane.xlu0 %595
        %v597 = vrcp.pop 32.0
        %v598 = vmul.f32 %v593, %v597
        %v599 = vmul.f32 %v596, %v597
        %v600 = vsub.f32 %v586, %v598
        %v601 = vsub.f32 %v587, %v599
        %v602 = vmul.f32 %v600, %v600
        %v603 = vmul.f32 %v601, %v601
        %v604 = vsel %vm590, %v602, 0.0
        %605 = vadd.xlane.f32.xlu0 %v604
        %v606 = vpop.xlane.xlu0 %605
        %v607 = vsel %vm590, %v603, 0.0
        %608 = vadd.xlane.f32.xlu0 %v607
        %v609 = vpop.xlane.xlu0 %608
        %v610 = vmul.f32 %v606, %v597
        %v611 = vmul.f32 %v609, %v597
        %v612 = vadd.f32 %v610, 1e-05
        %v613 = vadd.f32 %v611, 1e-05
        %v614 = vrsqrt.pop %v612
        %v615 = vrsqrt.pop %v613
        %v616 = vmul.f32 %v600, %v614
        %v617 = vmul.f32 %v601, %v615
        %v619 = vlaneseq
        %v620 = vshrl.u32 %v619, 7
        %v621 = vsub.s32 0, %v620
        %v622 = vrot.slane %v588, %v621
        %v624 = vmul.f32 %v616, %v622
        %v625 = vmul.f32 %v617, %v622
        %v627 = vlaneseq
        %v628 = vshrl.u32 %v627, 7
        %v629 = vsub.s32 0, %v628
        %v630 = vrot.slane %v589, %v629
        %v632 = vadd.f32 %v624, %v630
        %v633 = vadd.f32 %v625, %v630
        %v634 = vld [vmem:[%s551] sm:$0xff]
        %v635 = vld [vmem:[%s551 + $0x8] sm:$0xff]
        %v636 = vld [vmem:[%s551 + $0x10] sm:$0xff]
        %v637 = vld [vmem:[%s551 + $0x18] sm:$0xff]
        %v639 = vsel %vm590, %v632, 0
        %v642 = vsel %vm590, %v633, 0
        %644 = vmatprep.subr.mxu0 0.0
        %645 = vmatpush1.msra.mxu0 %v634
        %646 = vmatprep.subr.mxu0 0.0
        %647 = vmatpush1.msra.mxu0 %v635
        %648 = vmatprep.subr.mxu0 0.0
        %649 = vmatpush1.msra.mxu0 %v636
        %650 = vmatprep.subr.mxu0 0.0
        %651 = vmatpush1.msra.mxu0 %v637
        %652 = vmatprep.subr.mxu0 0.0
        %653 = vmatpush1.msra.mxu0 0.0
        %654 = vmatprep.subr.mxu0 0.0
        %655 = vmatpush1.msra.mxu0 0.0
        %656 = vmatprep.subr.mxu0 0.0
        %657 = vmatpush1.msra.mxu0 0.0
        %658 = vmatprep.subr.mxu0 0.0
        %659 = vmatpush1.msra.mxu0 0.0
        %660 = vmatprep.subr.mxu0 0.0
        %661 = vmatpush1.msra.mxu0 0.0
        %662 = vmatprep.subr.mxu0 0.0
        %663 = vmatpush1.msra.mxu0 0.0
        %664 = vmatprep.subr.mxu0 0.0
        %665 = vmatpush1.msra.mxu0 0.0
        %666 = vmatprep.subr.mxu0 0.0
        %667 = vmatpush1.msra.mxu0 0.0
        %668 = vmatprep.subr.mxu0 0.0
        %669 = vmatpush1.msra.mxu0 0.0
        %670 = vmatprep.subr.mxu0 0.0
        %671 = vmatpush1.msra.mxu0 0.0
        %672 = vmatprep.subr.mxu0 0.0
        %673 = vmatpush1.msra.mxu0 0.0
        %674 = vmatprep.subr.mxu0 0.0
        %675 = vmatpush1.msra.mxu0 0.0
        %676 = vmatprep.subr.mxu0 0.0
        %677 = vmatpush1.msra.mxu0 0.0
        %678 = vmatprep.subr.mxu0 0.0
        %679 = vmatpush1.msra.mxu0 0.0
        %680 = vmatprep.subr.mxu0 0.0
        %681 = vmatpush1.msra.mxu0 0.0
        %682 = vmatprep.subr.mxu0 0.0
        %683 = vmatpush1.msra.mxu0 0.0
        %684 = vmatprep.subr.mxu0 0.0
        %685 = vmatpush1.msra.mxu0 0.0
        %686 = vmatprep.subr.mxu0 0.0
        %687 = vmatpush1.msra.mxu0 0.0
        %688 = vmatprep.subr.mxu0 0.0
        %689 = vmatpush1.msra.mxu0 0.0
        %690 = vmatprep.subr.mxu0 0.0
        %691 = vmatpush1.msra.mxu0 0.0
        %692 = vmatprep.subr.mxu0 0.0
        %693 = vmatpush1.msra.mxu0 0.0
        %694 = vmatprep.subr.mxu0 0.0
        %695 = vmatpush1.msra.mxu0 0.0
        %696 = vmatprep.subr.mxu0 0.0
        %697 = vmatpush1.msra.mxu0 0.0
        %698 = vmatprep.subr.mxu0 0.0
        %699 = vmatpush1.msra.mxu0 0.0
        %700 = vmatprep.subr.mxu0 0.0
        %701 = vmatpush1.msra.mxu0 0.0
        %702 = vmatprep.subr.mxu0 0.0
        %703 = vmatpush1.msra.mxu0 0.0
        %704 = vmatprep.subr.mxu0 0.0
        %705 = vmatpush1.msra.mxu0 0.0
        %706 = vmatprep.subr.mxu0 0.0
        %707 = vmatpush1.msra.mxu0 0.0
        %708 = vmatprep.mubr.f32.mxu0 0.0
        %709 = vmatmul.mubr.f32.gmra.mrb[0].mxu0 %v639
        %v710 = vpop.f32.mrb[0].mxu0
        %v711 = vadd.f32 0.0, %v710
        %v712 = vpop.f32.mrb[0].mxu0
        %713 = vmatprep.mubr.f32.mxu0 0.0
        %714 = vmatmul.mubr.f32.gmra.mrb[0].mxu0 %v642
        %v715 = vpop.f32.mrb[0].mxu0
        %v716 = vadd.f32 0.0, %v715
        %v717 = vpop.f32.mrb[0].mxu0
        %718 = vdwg.mxu0
        %721 = vrot.lane.b32.xlu0 %v711, 120
        %v722 = vpop.permute.xlu0 %721
        %723 = vrot.lane.b32.xlu0 %v716, 120
        %v724 = vpop.permute.xlu0 %723
        %725 = vrot.lane.b32.xlu0 %v711, 112
        %v726 = vpop.permute.xlu0 %725
        %727 = vrot.lane.b32.xlu0 %v716, 112
        %v728 = vpop.permute.xlu0 %727
        %729 = vrot.lane.b32.xlu0 %v711, 104
        %v730 = vpop.permute.xlu0 %729
        %731 = vrot.lane.b32.xlu0 %v716, 104
        %v732 = vpop.permute.xlu0 %731
        %733 = vrot.lane.b32.xlu0 %v711, 96
        %v734 = vpop.permute.xlu0 %733
        %vm735 = vcmask 64512
        %v736 = vsel %vm735, %v711, 0
        %v738 = vsel %vm735, %v734, 0
        %740 = vmatprep.subr.mxu0 0.0
        %741 = vmatpush1.xpose.msra.mxu0 %v738
        %742 = vmatprep.subr.mxu0 0.0
        %743 = vmatpush1.xpose.msra.mxu0 0.0
        %744 = vmatprep.subr.mxu0 0.0
        %745 = vmatpush1.xpose.msra.mxu0 0.0
        %746 = vmatprep.subr.mxu0 0.0
        %747 = vmatpush1.xpose.msra.mxu0 0.0
        %748 = vmatprep.subr.mxu0 0.0
        %749 = vmatpush1.xpose.msra.mxu0 0.0
        %750 = vmatprep.subr.mxu0 0.0
        %751 = vmatpush1.xpose.msra.mxu0 0.0
        %752 = vmatprep.subr.mxu0 0.0
        %753 = vmatpush1.xpose.msra.mxu0 0.0
        %754 = vmatprep.subr.mxu0 0.0
        %755 = vmatpush1.xpose.msra.mxu0 0.0
        %756 = vmatprep.subr.mxu0 0.0
        %757 = vmatpush1.xpose.msra.mxu0 0.0
        %758 = vmatprep.subr.mxu0 0.0
        %759 = vmatpush1.xpose.msra.mxu0 0.0
        %760 = vmatprep.subr.mxu0 0.0
        %761 = vmatpush1.xpose.msra.mxu0 0.0
        %762 = vmatprep.subr.mxu0 0.0
        %763 = vmatpush1.xpose.msra.mxu0 0.0
        %764 = vmatprep.subr.mxu0 0.0
        %765 = vmatpush1.xpose.msra.mxu0 0.0
        %766 = vmatprep.subr.mxu0 0.0
        %767 = vmatpush1.xpose.msra.mxu0 0.0
        %768 = vmatprep.subr.mxu0 0.0
        %769 = vmatpush1.xpose.msra.mxu0 0.0
        %770 = vmatprep.subr.mxu0 0.0
        %771 = vmatpush1.xpose.msra.mxu0 0.0
        %772 = vmatprep.subr.mxu0 0.0
        %773 = vmatpush1.xpose.msra.mxu0 0.0
        %774 = vmatprep.subr.mxu0 0.0
        %775 = vmatpush1.xpose.msra.mxu0 0.0
        %776 = vmatprep.subr.mxu0 0.0
        %777 = vmatpush1.xpose.msra.mxu0 0.0
        %778 = vmatprep.subr.mxu0 0.0
        %779 = vmatpush1.xpose.msra.mxu0 0.0
        %780 = vmatprep.subr.mxu0 0.0
        %781 = vmatpush1.xpose.msra.mxu0 0.0
        %782 = vmatprep.subr.mxu0 0.0
        %783 = vmatpush1.xpose.msra.mxu0 0.0
        %784 = vmatprep.subr.mxu0 0.0
        %785 = vmatpush1.xpose.msra.mxu0 0.0
        %786 = vmatprep.subr.mxu0 0.0
        %787 = vmatpush1.xpose.msra.mxu0 0.0
        %788 = vmatprep.subr.mxu0 0.0
        %789 = vmatpush1.xpose.msra.mxu0 0.0
        %790 = vmatprep.subr.mxu0 0.0
        %791 = vmatpush1.xpose.msra.mxu0 0.0
        %792 = vmatprep.subr.mxu0 0.0
        %793 = vmatpush1.xpose.msra.mxu0 0.0
        %794 = vmatprep.subr.mxu0 0.0
        %795 = vmatpush1.xpose.msra.mxu0 0.0
        %796 = vmatprep.subr.mxu0 0.0
        %797 = vmatpush1.xpose.msra.mxu0 0.0
        %798 = vmatprep.subr.mxu0 0.0
        %799 = vmatpush1.xpose.msra.mxu0 0.0
        %800 = vmatprep.subr.mxu0 0.0
        %801 = vmatpush1.xpose.msra.mxu0 0.0
        %802 = vmatprep.subr.mxu0 0.0
        %803 = vmatpush1.xpose.msra.mxu0 0.0
        %804 = vmatprep.mubr.f32.mxu0 0.0
        %805 = vmatmul.mubr.f32.gmra.mrb[0].mxu0 %v736
        %v806 = vpop.f32.mrb[0].mxu0
        %v807 = vadd.f32 0.0, %v806
        %v808 = vpop.f32.mrb[0].mxu0
        %809 = vdwg.mxu0
        %810 = vrot.lane.b32.xlu0 %v716, 96
        %v811 = vpop.permute.xlu0 %810
        %v812 = vsel %vm735, %v716, 0
        %v814 = vsel %vm735, %v811, 0
        %816 = vmatprep.subr.mxu0 0.0
        %817 = vmatpush1.xpose.msra.mxu0 %v814
        %818 = vmatprep.subr.mxu0 0.0
        %819 = vmatpush1.xpose.msra.mxu0 0.0
        %820 = vmatprep.subr.mxu0 0.0
        %821 = vmatpush1.xpose.msra.mxu0 0.0
        %822 = vmatprep.subr.mxu0 0.0
        %823 = vmatpush1.xpose.msra.mxu0 0.0
        %824 = vmatprep.subr.mxu0 0.0
        %825 = vmatpush1.xpose.msra.mxu0 0.0
        %826 = vmatprep.subr.mxu0 0.0
        %827 = vmatpush1.xpose.msra.mxu0 0.0
        %828 = vmatprep.subr.mxu0 0.0
        %829 = vmatpush1.xpose.msra.mxu0 0.0
        %830 = vmatprep.subr.mxu0 0.0
        %831 = vmatpush1.xpose.msra.mxu0 0.0
        %832 = vmatprep.subr.mxu0 0.0
        %833 = vmatpush1.xpose.msra.mxu0 0.0
        %834 = vmatprep.subr.mxu0 0.0
        %835 = vmatpush1.xpose.msra.mxu0 0.0
        %836 = vmatprep.subr.mxu0 0.0
        %837 = vmatpush1.xpose.msra.mxu0 0.0
        %838 = vmatprep.subr.mxu0 0.0
        %839 = vmatpush1.xpose.msra.mxu0 0.0
        %840 = vmatprep.subr.mxu0 0.0
        %841 = vmatpush1.xpose.msra.mxu0 0.0
        %842 = vmatprep.subr.mxu0 0.0
        %843 = vmatpush1.xpose.msra.mxu0 0.0
        %844 = vmatprep.subr.mxu0 0.0
        %845 = vmatpush1.xpose.msra.mxu0 0.0
        %846 = vmatprep.subr.mxu0 0.0
        %847 = vmatpush1.xpose.msra.mxu0 0.0
        %848 = vmatprep.subr.mxu0 0.0
        %849 = vmatpush1.xpose.msra.mxu0 0.0
        %850 = vmatprep.subr.mxu0 0.0
        %851 = vmatpush1.xpose.msra.mxu0 0.0
        %852 = vmatprep.subr.mxu0 0.0
        %853 = vmatpush1.xpose.msra.mxu0 0.0
        %854 = vmatprep.subr.mxu0 0.0
        %855 = vmatpush1.xpose.msra.mxu0 0.0
        %856 = vmatprep.subr.mxu0 0.0
        %857 = vmatpush1.xpose.msra.mxu0 0.0
        %858 = vmatprep.subr.mxu0 0.0
        %859 = vmatpush1.xpose.msra.mxu0 0.0
        %860 = vmatprep.subr.mxu0 0.0
        %861 = vmatpush1.xpose.msra.mxu0 0.0
        %862 = vmatprep.subr.mxu0 0.0
        %863 = vmatpush1.xpose.msra.mxu0 0.0
        %864 = vmatprep.subr.mxu0 0.0
        %865 = vmatpush1.xpose.msra.mxu0 0.0
        %866 = vmatprep.subr.mxu0 0.0
        %867 = vmatpush1.xpose.msra.mxu0 0.0
        %868 = vmatprep.subr.mxu0 0.0
        %869 = vmatpush1.xpose.msra.mxu0 0.0
        %870 = vmatprep.subr.mxu0 0.0
        %871 = vmatpush1.xpose.msra.mxu0 0.0
        %872 = vmatprep.subr.mxu0 0.0
        %873 = vmatpush1.xpose.msra.mxu0 0.0
        %874 = vmatprep.subr.mxu0 0.0
        %875 = vmatpush1.xpose.msra.mxu0 0.0
        %876 = vmatprep.subr.mxu0 0.0
        %877 = vmatpush1.xpose.msra.mxu0 0.0
        %878 = vmatprep.subr.mxu0 0.0
        %879 = vmatpush1.xpose.msra.mxu0 0.0
        %880 = vmatprep.mubr.f32.mxu0 0.0
        %881 = vmatmul.mubr.f32.gmra.mrb[0].mxu0 %v812
        %v882 = vpop.f32.mrb[0].mxu0
        %v883 = vadd.f32 0.0, %v882
        %v884 = vpop.f32.mrb[0].mxu0
        %885 = vdwg.mxu0
        %886 = vrot.lane.b32.xlu0 %v722, 96
        %v887 = vpop.permute.xlu0 %886
        %v888 = vsel %vm735, %v722, 0
        %v890 = vsel %vm735, %v887, 0
        %892 = vmatprep.subr.mxu0 0.0
        %893 = vmatpush1.xpose.msra.mxu0 %v890
        %894 = vmatprep.subr.mxu0 0.0
        %895 = vmatpush1.xpose.msra.mxu0 0.0
        %896 = vmatprep.subr.mxu0 0.0
        %897 = vmatpush1.xpose.msra.mxu0 0.0
        %898 = vmatprep.subr.mxu0 0.0
        %899 = vmatpush1.xpose.msra.mxu0 0.0
        %900 = vmatprep.subr.mxu0 0.0
        %901 = vmatpush1.xpose.msra.mxu0 0.0
        %902 = vmatprep.subr.mxu0 0.0
        %903 = vmatpush1.xpose.msra.mxu0 0.0
        %904 = vmatprep.subr.mxu0 0.0
        %905 = vmatpush1.xpose.msra.mxu0 0.0
        %906 = vmatprep.subr.mxu0 0.0
        %907 = vmatpush1.xpose.msra.mxu0 0.0
        %908 = vmatprep.subr.mxu0 0.0
        %909 = vmatpush1.xpose.msra.mxu0 0.0
        %910 = vmatprep.subr.mxu0 0.0
        %911 = vmatpush1.xpose.msra.mxu0 0.0
        %912 = vmatprep.subr.mxu0 0.0
        %913 = vmatpush1.xpose.msra.mxu0 0.0
        %914 = vmatprep.subr.mxu0 0.0
        %915 = vmatpush1.xpose.msra.mxu0 0.0
        %916 = vmatprep.subr.mxu0 0.0
        %917 = vmatpush1.xpose.msra.mxu0 0.0
        %918 = vmatprep.subr.mxu0 0.0
        %919 = vmatpush1.xpose.msra.mxu0 0.0
        %920 = vmatprep.subr.mxu0 0.0
        %921 = vmatpush1.xpose.msra.mxu0 0.0
        %922 = vmatprep.subr.mxu0 0.0
        %923 = vmatpush1.xpose.msra.mxu0 0.0
        %924 = vmatprep.subr.mxu0 0.0
        %925 = vmatpush1.xpose.msra.mxu0 0.0
        %926 = vmatprep.subr.mxu0 0.0
        %927 = vmatpush1.xpose.msra.mxu0 0.0
        %928 = vmatprep.subr.mxu0 0.0
        %929 = vmatpush1.xpose.msra.mxu0 0.0
        %930 = vmatprep.subr.mxu0 0.0
        %931 = vmatpush1.xpose.msra.mxu0 0.0
        %932 = vmatprep.subr.mxu0 0.0
        %933 = vmatpush1.xpose.msra.mxu0 0.0
        %934 = vmatprep.subr.mxu0 0.0
        %935 = vmatpush1.xpose.msra.mxu0 0.0
        %936 = vmatprep.subr.mxu0 0.0
        %937 = vmatpush1.xpose.msra.mxu0 0.0
        %938 = vmatprep.subr.mxu0 0.0
        %939 = vmatpush1.xpose.msra.mxu0 0.0
        %940 = vmatprep.subr.mxu0 0.0
        %941 = vmatpush1.xpose.msra.mxu0 0.0
        %942 = vmatprep.subr.mxu0 0.0
        %943 = vmatpush1.xpose.msra.mxu0 0.0
        %944 = vmatprep.subr.mxu0 0.0
        %945 = vmatpush1.xpose.msra.mxu0 0.0
        %946 = vmatprep.subr.mxu0 0.0
        %947 = vmatpush1.xpose.msra.mxu0 0.0
        %948 = vmatprep.subr.mxu0 0.0
        %949 = vmatpush1.xpose.msra.mxu0 0.0
        %950 = vmatprep.subr.mxu0 0.0
        %951 = vmatpush1.xpose.msra.mxu0 0.0
        %952 = vmatprep.subr.mxu0 0.0
        %953 = vmatpush1.xpose.msra.mxu0 0.0
        %954 = vmatprep.subr.mxu0 0.0
        %955 = vmatpush1.xpose.msra.mxu0 0.0
        %956 = vmatprep.mubr.f32.mxu0 0.0
        %957 = vmatmul.mubr.f32.gmra.mrb[0].mxu0 %v888
        %v958 = vpop.f32.mrb[0].mxu0
        %v959 = vadd.f32 0.0, %v958
        %v960 = vpop.f32.mrb[0].mxu0
        %961 = vdwg.mxu0
        %962 = vrot.lane.b32.xlu0 %v724, 96
        %v963 = vpop.permute.xlu0 %962
        %v964 = vsel %vm735, %v724, 0
        %v966 = vsel %vm735, %v963, 0
        %968 = vmatprep.subr.mxu0 0.0
        %969 = vmatpush1.xpose.msra.mxu0 %v966
        %970 = vmatprep.subr.mxu0 0.0
        %971 = vmatpush1.xpose.msra.mxu0 0.0
        %972 = vmatprep.subr.mxu0 0.0
        %973 = vmatpush1.xpose.msra.mxu0 0.0
        %974 = vmatprep.subr.mxu0 0.0
        %975 = vmatpush1.xpose.msra.mxu0 0.0
        %976 = vmatprep.subr.mxu0 0.0
        %977 = vmatpush1.xpose.msra.mxu0 0.0
        %978 = vmatprep.subr.mxu0 0.0
        %979 = vmatpush1.xpose.msra.mxu0 0.0
        %980 = vmatprep.subr.mxu0 0.0
        %981 = vmatpush1.xpose.msra.mxu0 0.0
        %982 = vmatprep.subr.mxu0 0.0
        %983 = vmatpush1.xpose.msra.mxu0 0.0
        %984 = vmatprep.subr.mxu0 0.0
        %985 = vmatpush1.xpose.msra.mxu0 0.0
        %986 = vmatprep.subr.mxu0 0.0
        %987 = vmatpush1.xpose.msra.mxu0 0.0
        %988 = vmatprep.subr.mxu0 0.0
        %989 = vmatpush1.xpose.msra.mxu0 0.0
        %990 = vmatprep.subr.mxu0 0.0
        %991 = vmatpush1.xpose.msra.mxu0 0.0
        %992 = vmatprep.subr.mxu0 0.0
        %993 = vmatpush1.xpose.msra.mxu0 0.0
        %994 = vmatprep.subr.mxu0 0.0
        %995 = vmatpush1.xpose.msra.mxu0 0.0
        %996 = vmatprep.subr.mxu0 0.0
        %997 = vmatpush1.xpose.msra.mxu0 0.0
        %998 = vmatprep.subr.mxu0 0.0
        %999 = vmatpush1.xpose.msra.mxu0 0.0
        %1000 = vmatprep.subr.mxu0 0.0
        %1001 = vmatpush1.xpose.msra.mxu0 0.0
        %1002 = vmatprep.subr.mxu0 0.0
        %1003 = vmatpush1.xpose.msra.mxu0 0.0
        %1004 = vmatprep.subr.mxu0 0.0
        %1005 = vmatpush1.xpose.msra.mxu0 0.0
        %1006 = vmatprep.subr.mxu0 0.0
        %1007 = vmatpush1.xpose.msra.mxu0 0.0
        %1008 = vmatprep.subr.mxu0 0.0
        %1009 = vmatpush1.xpose.msra.mxu0 0.0
        %1010 = vmatprep.subr.mxu0 0.0
        %1011 = vmatpush1.xpose.msra.mxu0 0.0
        %1012 = vmatprep.subr.mxu0 0.0
        %1013 = vmatpush1.xpose.msra.mxu0 0.0
        %1014 = vmatprep.subr.mxu0 0.0
        %1015 = vmatpush1.xpose.msra.mxu0 0.0
        %1016 = vmatprep.subr.mxu0 0.0
        %1017 = vmatpush1.xpose.msra.mxu0 0.0
        %1018 = vmatprep.subr.mxu0 0.0
        %1019 = vmatpush1.xpose.msra.mxu0 0.0
        %1020 = vmatprep.subr.mxu0 0.0
        %1021 = vmatpush1.xpose.msra.mxu0 0.0
        %1022 = vmatprep.subr.mxu0 0.0
        %1023 = vmatpush1.xpose.msra.mxu0 0.0
        %1024 = vmatprep.subr.mxu0 0.0
        %1025 = vmatpush1.xpose.msra.mxu0 0.0
        %1026 = vmatprep.subr.mxu0 0.0
        %1027 = vmatpush1.xpose.msra.mxu0 0.0
        %1028 = vmatprep.subr.mxu0 0.0
        %1029 = vmatpush1.xpose.msra.mxu0 0.0
        %1030 = vmatprep.subr.mxu0 0.0
        %1031 = vmatpush1.xpose.msra.mxu0 0.0
        %1032 = vmatprep.mubr.f32.mxu0 0.0
        %1033 = vmatmul.mubr.f32.gmra.mrb[0].mxu0 %v964
        %v1034 = vpop.f32.mrb[0].mxu0
        %v1035 = vadd.f32 0.0, %v1034
        %v1036 = vpop.f32.mrb[0].mxu0
        %1037 = vdwg.mxu0
        %1038 = vrot.lane.b32.xlu0 %v726, 96
        %v1039 = vpop.permute.xlu0 %1038
        %v1040 = vsel %vm735, %v726, 0
        %v1042 = vsel %vm735, %v1039, 0
        %1044 = vmatprep.subr.mxu0 0.0
        %1045 = vmatpush1.xpose.msra.mxu0 %v1042
        %1046 = vmatprep.subr.mxu0 0.0
        %1047 = vmatpush1.xpose.msra.mxu0 0.0
        %1048 = vmatprep.subr.mxu0 0.0
        %1049 = vmatpush1.xpose.msra.mxu0 0.0
        %1050 = vmatprep.subr.mxu0 0.0
        %1051 = vmatpush1.xpose.msra.mxu0 0.0
        %1052 = vmatprep.subr.mxu0 0.0
        %1053 = vmatpush1.xpose.msra.mxu0 0.0
        %1054 = vmatprep.subr.mxu0 0.0
        %1055 = vmatpush1.xpose.msra.mxu0 0.0
        %1056 = vmatprep.subr.mxu0 0.0
        %1057 = vmatpush1.xpose.msra.mxu0 0.0
        %1058 = vmatprep.subr.mxu0 0.0
        %1059 = vmatpush1.xpose.msra.mxu0 0.0
        %1060 = vmatprep.subr.mxu0 0.0
        %1061 = vmatpush1.xpose.msra.mxu0 0.0
        %1062 = vmatprep.subr.mxu0 0.0
        %1063 = vmatpush1.xpose.msra.mxu0 0.0
        %1064 = vmatprep.subr.mxu0 0.0
        %1065 = vmatpush1.xpose.msra.mxu0 0.0
        %1066 = vmatprep.subr.mxu0 0.0
        %1067 = vmatpush1.xpose.msra.mxu0 0.0
        %1068 = vmatprep.subr.mxu0 0.0
        %1069 = vmatpush1.xpose.msra.mxu0 0.0
        %1070 = vmatprep.subr.mxu0 0.0
        %1071 = vmatpush1.xpose.msra.mxu0 0.0
        %1072 = vmatprep.subr.mxu0 0.0
        %1073 = vmatpush1.xpose.msra.mxu0 0.0
        %1074 = vmatprep.subr.mxu0 0.0
        %1075 = vmatpush1.xpose.msra.mxu0 0.0
        %1076 = vmatprep.subr.mxu0 0.0
        %1077 = vmatpush1.xpose.msra.mxu0 0.0
        %1078 = vmatprep.subr.mxu0 0.0
        %1079 = vmatpush1.xpose.msra.mxu0 0.0
        %1080 = vmatprep.subr.mxu0 0.0
        %1081 = vmatpush1.xpose.msra.mxu0 0.0
        %1082 = vmatprep.subr.mxu0 0.0
        %1083 = vmatpush1.xpose.msra.mxu0 0.0
        %1084 = vmatprep.subr.mxu0 0.0
        %1085 = vmatpush1.xpose.msra.mxu0 0.0
        %1086 = vmatprep.subr.mxu0 0.0
        %1087 = vmatpush1.xpose.msra.mxu0 0.0
        %1088 = vmatprep.subr.mxu0 0.0
        %1089 = vmatpush1.xpose.msra.mxu0 0.0
        %1090 = vmatprep.subr.mxu0 0.0
        %1091 = vmatpush1.xpose.msra.mxu0 0.0
        %1092 = vmatprep.subr.mxu0 0.0
        %1093 = vmatpush1.xpose.msra.mxu0 0.0
        %1094 = vmatprep.subr.mxu0 0.0
        %1095 = vmatpush1.xpose.msra.mxu0 0.0
        %1096 = vmatprep.subr.mxu0 0.0
        %1097 = vmatpush1.xpose.msra.mxu0 0.0
        %1098 = vmatprep.subr.mxu0 0.0
        %1099 = vmatpush1.xpose.msra.mxu0 0.0
        %1100 = vmatprep.subr.mxu0 0.0
        %1101 = vmatpush1.xpose.msra.mxu0 0.0
        %1102 = vmatprep.subr.mxu0 0.0
        %1103 = vmatpush1.xpose.msra.mxu0 0.0
        %1104 = vmatprep.subr.mxu0 0.0
        %1105 = vmatpush1.xpose.msra.mxu0 0.0
        %1106 = vmatprep.subr.mxu0 0.0
        %1107 = vmatpush1.xpose.msra.mxu0 0.0
        %1108 = vmatprep.mubr.f32.mxu0 0.0
        %1109 = vmatmul.mubr.f32.gmra.mrb[0].mxu0 %v1040
        %v1110 = vpop.f32.mrb[0].mxu0
        %v1111 = vadd.f32 0.0, %v1110
        %v1112 = vpop.f32.mrb[0].mxu0
        %1113 = vdwg.mxu0
        %1114 = vrot.lane.b32.xlu0 %v728, 96
        %v1115 = vpop.permute.xlu0 %1114
        %v1116 = vsel %vm735, %v728, 0
        %v1118 = vsel %vm735, %v1115, 0
        %1120 = vmatprep.subr.mxu0 0.0
        %1121 = vmatpush1.xpose.msra.mxu0 %v1118
        %1122 = vmatprep.subr.mxu0 0.0
        %1123 = vmatpush1.xpose.msra.mxu0 0.0
        %1124 = vmatprep.subr.mxu0 0.0
        %1125 = vmatpush1.xpose.msra.mxu0 0.0
        %1126 = vmatprep.subr.mxu0 0.0
        %1127 = vmatpush1.xpose.msra.mxu0 0.0
        %1128 = vmatprep.subr.mxu0 0.0
        %1129 = vmatpush1.xpose.msra.mxu0 0.0
        %1130 = vmatprep.subr.mxu0 0.0
        %1131 = vmatpush1.xpose.msra.mxu0 0.0
        %1132 = vmatprep.subr.mxu0 0.0
        %1133 = vmatpush1.xpose.msra.mxu0 0.0
        %1134 = vmatprep.subr.mxu0 0.0
        %1135 = vmatpush1.xpose.msra.mxu0 0.0
        %1136 = vmatprep.subr.mxu0 0.0
        %1137 = vmatpush1.xpose.msra.mxu0 0.0
        %1138 = vmatprep.subr.mxu0 0.0
        %1139 = vmatpush1.xpose.msra.mxu0 0.0
        %1140 = vmatprep.subr.mxu0 0.0
        %1141 = vmatpush1.xpose.msra.mxu0 0.0
        %1142 = vmatprep.subr.mxu0 0.0
        %1143 = vmatpush1.xpose.msra.mxu0 0.0
        %1144 = vmatprep.subr.mxu0 0.0
        %1145 = vmatpush1.xpose.msra.mxu0 0.0
        %1146 = vmatprep.subr.mxu0 0.0
        %1147 = vmatpush1.xpose.msra.mxu0 0.0
        %1148 = vmatprep.subr.mxu0 0.0
        %1149 = vmatpush1.xpose.msra.mxu0 0.0
        %1150 = vmatprep.subr.mxu0 0.0
        %1151 = vmatpush1.xpose.msra.mxu0 0.0
        %1152 = vmatprep.subr.mxu0 0.0
        %1153 = vmatpush1.xpose.msra.mxu0 0.0
        %1154 = vmatprep.subr.mxu0 0.0
        %1155 = vmatpush1.xpose.msra.mxu0 0.0
        %1156 = vmatprep.subr.mxu0 0.0
        %1157 = vmatpush1.xpose.msra.mxu0 0.0
        %1158 = vmatprep.subr.mxu0 0.0
        %1159 = vmatpush1.xpose.msra.mxu0 0.0
        %1160 = vmatprep.subr.mxu0 0.0
        %1161 = vmatpush1.xpose.msra.mxu0 0.0
        %1162 = vmatprep.subr.mxu0 0.0
        %1163 = vmatpush1.xpose.msra.mxu0 0.0
        %1164 = vmatprep.subr.mxu0 0.0
        %1165 = vmatpush1.xpose.msra.mxu0 0.0
        %1166 = vmatprep.subr.mxu0 0.0
        %1167 = vmatpush1.xpose.msra.mxu0 0.0
        %1168 = vmatprep.subr.mxu0 0.0
        %1169 = vmatpush1.xpose.msra.mxu0 0.0
        %1170 = vmatprep.subr.mxu0 0.0
        %1171 = vmatpush1.xpose.msra.mxu0 0.0
        %1172 = vmatprep.subr.mxu0 0.0
        %1173 = vmatpush1.xpose.msra.mxu0 0.0
        %1174 = vmatprep.subr.mxu0 0.0
        %1175 = vmatpush1.xpose.msra.mxu0 0.0
        %1176 = vmatprep.subr.mxu0 0.0
        %1177 = vmatpush1.xpose.msra.mxu0 0.0
        %1178 = vmatprep.subr.mxu0 0.0
        %1179 = vmatpush1.xpose.msra.mxu0 0.0
        %1180 = vmatprep.subr.mxu0 0.0
        %1181 = vmatpush1.xpose.msra.mxu0 0.0
        %1182 = vmatprep.subr.mxu0 0.0
        %1183 = vmatpush1.xpose.msra.mxu0 0.0
        %1184 = vmatprep.mubr.f32.mxu0 0.0
        %1185 = vmatmul.mubr.f32.gmra.mrb[0].mxu0 %v1116
        %v1186 = vpop.f32.mrb[0].mxu0
        %v1187 = vadd.f32 0.0, %v1186
        %v1188 = vpop.f32.mrb[0].mxu0
        %1189 = vdwg.mxu0
        %1190 = vrot.lane.b32.xlu0 %v730, 96
        %v1191 = vpop.permute.xlu0 %1190
        %v1192 = vsel %vm735, %v730, 0
        %v1194 = vsel %vm735, %v1191, 0
        %1196 = vmatprep.subr.mxu0 0.0
        %1197 = vmatpush1.xpose.msra.mxu0 %v1194
        %1198 = vmatprep.subr.mxu0 0.0
        %1199 = vmatpush1.xpose.msra.mxu0 0.0
        %1200 = vmatprep.subr.mxu0 0.0
        %1201 = vmatpush1.xpose.msra.mxu0 0.0
        %1202 = vmatprep.subr.mxu0 0.0
        %1203 = vmatpush1.xpose.msra.mxu0 0.0
        %1204 = vmatprep.subr.mxu0 0.0
        %1205 = vmatpush1.xpose.msra.mxu0 0.0
        %1206 = vmatprep.subr.mxu0 0.0
        %1207 = vmatpush1.xpose.msra.mxu0 0.0
        %1208 = vmatprep.subr.mxu0 0.0
        %1209 = vmatpush1.xpose.msra.mxu0 0.0
        %1210 = vmatprep.subr.mxu0 0.0
        %1211 = vmatpush1.xpose.msra.mxu0 0.0
        %1212 = vmatprep.subr.mxu0 0.0
        %1213 = vmatpush1.xpose.msra.mxu0 0.0
        %1214 = vmatprep.subr.mxu0 0.0
        %1215 = vmatpush1.xpose.msra.mxu0 0.0
        %1216 = vmatprep.subr.mxu0 0.0
        %1217 = vmatpush1.xpose.msra.mxu0 0.0
        %1218 = vmatprep.subr.mxu0 0.0
        %1219 = vmatpush1.xpose.msra.mxu0 0.0
        %1220 = vmatprep.subr.mxu0 0.0
        %1221 = vmatpush1.xpose.msra.mxu0 0.0
        %1222 = vmatprep.subr.mxu0 0.0
        %1223 = vmatpush1.xpose.msra.mxu0 0.0
        %1224 = vmatprep.subr.mxu0 0.0
        %1225 = vmatpush1.xpose.msra.mxu0 0.0
        %1226 = vmatprep.subr.mxu0 0.0
        %1227 = vmatpush1.xpose.msra.mxu0 0.0
        %1228 = vmatprep.subr.mxu0 0.0
        %1229 = vmatpush1.xpose.msra.mxu0 0.0
        %1230 = vmatprep.subr.mxu0 0.0
        %1231 = vmatpush1.xpose.msra.mxu0 0.0
        %1232 = vmatprep.subr.mxu0 0.0
        %1233 = vmatpush1.xpose.msra.mxu0 0.0
        %1234 = vmatprep.subr.mxu0 0.0
        %1235 = vmatpush1.xpose.msra.mxu0 0.0
        %1236 = vmatprep.subr.mxu0 0.0
        %1237 = vmatpush1.xpose.msra.mxu0 0.0
        %1238 = vmatprep.subr.mxu0 0.0
        %1239 = vmatpush1.xpose.msra.mxu0 0.0
        %1240 = vmatprep.subr.mxu0 0.0
        %1241 = vmatpush1.xpose.msra.mxu0 0.0
        %1242 = vmatprep.subr.mxu0 0.0
        %1243 = vmatpush1.xpose.msra.mxu0 0.0
        %1244 = vmatprep.subr.mxu0 0.0
        %1245 = vmatpush1.xpose.msra.mxu0 0.0
        %1246 = vmatprep.subr.mxu0 0.0
        %1247 = vmatpush1.xpose.msra.mxu0 0.0
        %1248 = vmatprep.subr.mxu0 0.0
        %1249 = vmatpush1.xpose.msra.mxu0 0.0
        %1250 = vmatprep.subr.mxu0 0.0
        %1251 = vmatpush1.xpose.msra.mxu0 0.0
        %1252 = vmatprep.subr.mxu0 0.0
        %1253 = vmatpush1.xpose.msra.mxu0 0.0
        %1254 = vmatprep.subr.mxu0 0.0
        %1255 = vmatpush1.xpose.msra.mxu0 0.0
        %1256 = vmatprep.subr.mxu0 0.0
        %1257 = vmatpush1.xpose.msra.mxu0 0.0
        %1258 = vmatprep.subr.mxu0 0.0
        %1259 = vmatpush1.xpose.msra.mxu0 0.0
        %1260 = vmatprep.mubr.f32.mxu0 0.0
        %1261 = vmatmul.mubr.f32.gmra.mrb[0].mxu0 %v1192
        %v1262 = vpop.f32.mrb[0].mxu0
        %v1263 = vadd.f32 0.0, %v1262
        %v1264 = vpop.f32.mrb[0].mxu0
        %1265 = vdwg.mxu0
        %1266 = vrot.lane.b32.xlu0 %v732, 96
        %v1267 = vpop.permute.xlu0 %1266
        %v1268 = vsel %vm735, %v732, 0
        %v1270 = vsel %vm735, %v1267, 0
        %1272 = vmatprep.subr.mxu0 0.0
        %1273 = vmatpush1.xpose.msra.mxu0 %v1270
        %1274 = vmatprep.subr.mxu0 0.0
        %1275 = vmatpush1.xpose.msra.mxu0 0.0
        %1276 = vmatprep.subr.mxu0 0.0
        %1277 = vmatpush1.xpose.msra.mxu0 0.0
        %1278 = vmatprep.subr.mxu0 0.0
        %1279 = vmatpush1.xpose.msra.mxu0 0.0
        %1280 = vmatprep.subr.mxu0 0.0
        %1281 = vmatpush1.xpose.msra.mxu0 0.0
        %1282 = vmatprep.subr.mxu0 0.0
        %1283 = vmatpush1.xpose.msra.mxu0 0.0
        %1284 = vmatprep.subr.mxu0 0.0
        %1285 = vmatpush1.xpose.msra.mxu0 0.0
        %1286 = vmatprep.subr.mxu0 0.0
        %1287 = vmatpush1.xpose.msra.mxu0 0.0
        %1288 = vmatprep.subr.mxu0 0.0
        %1289 = vmatpush1.xpose.msra.mxu0 0.0
        %1290 = vmatprep.subr.mxu0 0.0
        %1291 = vmatpush1.xpose.msra.mxu0 0.0
        %1292 = vmatprep.subr.mxu0 0.0
        %1293 = vmatpush1.xpose.msra.mxu0 0.0
        %1294 = vmatprep.subr.mxu0 0.0
        %1295 = vmatpush1.xpose.msra.mxu0 0.0
        %1296 = vmatprep.subr.mxu0 0.0
        %1297 = vmatpush1.xpose.msra.mxu0 0.0
        %1298 = vmatprep.subr.mxu0 0.0
        %1299 = vmatpush1.xpose.msra.mxu0 0.0
        %1300 = vmatprep.subr.mxu0 0.0
        %1301 = vmatpush1.xpose.msra.mxu0 0.0
        %1302 = vmatprep.subr.mxu0 0.0
        %1303 = vmatpush1.xpose.msra.mxu0 0.0
        %1304 = vmatprep.subr.mxu0 0.0
        %1305 = vmatpush1.xpose.msra.mxu0 0.0
        %1306 = vmatprep.subr.mxu0 0.0
        %1307 = vmatpush1.xpose.msra.mxu0 0.0
        %1308 = vmatprep.subr.mxu0 0.0
        %1309 = vmatpush1.xpose.msra.mxu0 0.0
        %1310 = vmatprep.subr.mxu0 0.0
        %1311 = vmatpush1.xpose.msra.mxu0 0.0
        %1312 = vmatprep.subr.mxu0 0.0
        %1313 = vmatpush1.xpose.msra.mxu0 0.0
        %1314 = vmatprep.subr.mxu0 0.0
        %1315 = vmatpush1.xpose.msra.mxu0 0.0
        %1316 = vmatprep.subr.mxu0 0.0
        %1317 = vmatpush1.xpose.msra.mxu0 0.0
        %1318 = vmatprep.subr.mxu0 0.0
        %1319 = vmatpush1.xpose.msra.mxu0 0.0
        %1320 = vmatprep.subr.mxu0 0.0
        %1321 = vmatpush1.xpose.msra.mxu0 0.0
        %1322 = vmatprep.subr.mxu0 0.0
        %1323 = vmatpush1.xpose.msra.mxu0 0.0
        %1324 = vmatprep.subr.mxu0 0.0
        %1325 = vmatpush1.xpose.msra.mxu0 0.0
        %1326 = vmatprep.subr.mxu0 0.0
        %1327 = vmatpush1.xpose.msra.mxu0 0.0
        %1328 = vmatprep.subr.mxu0 0.0
        %1329 = vmatpush1.xpose.msra.mxu0 0.0
        %1330 = vmatprep.subr.mxu0 0.0
        %1331 = vmatpush1.xpose.msra.mxu0 0.0
        %1332 = vmatprep.subr.mxu0 0.0
        %1333 = vmatpush1.xpose.msra.mxu0 0.0
        %1334 = vmatprep.subr.mxu0 0.0
        %1335 = vmatpush1.xpose.msra.mxu0 0.0
        %1336 = vmatprep.mubr.f32.mxu0 0.0
        %1337 = vmatmul.mubr.f32.gmra.mrb[0].mxu0 %v1268
        %v1338 = vpop.f32.mrb[0].mxu0
        %v1339 = vadd.f32 0.0, %v1338
        %v1340 = vpop.f32.mrb[0].mxu0
        %1341 = vdwg.mxu0
        %v1342 = vsel %vm735, %v807, -inf
        %1343 = vmax.xlane.f32.xlu0 %v1342
        %v1344 = vpop.xlane.xlu0 %1343
        %v1345 = vsel %vm735, %v883, -inf
        %1346 = vmax.xlane.f32.xlu0 %v1345
        %v1347 = vpop.xlane.xlu0 %1346
        %v1348 = vsel %vm735, %v959, -inf
        %1349 = vmax.xlane.f32.xlu0 %v1348
        %v1350 = vpop.xlane.xlu0 %1349
        %v1351 = vsel %vm735, %v1035, -inf
        %1352 = vmax.xlane.f32.xlu0 %v1351
        %v1353 = vpop.xlane.xlu0 %1352
        %v1354 = vsel %vm735, %v1111, -inf
        %1355 = vmax.xlane.f32.xlu0 %v1354
        %v1356 = vpop.xlane.xlu0 %1355
        %v1357 = vsel %vm735, %v1187, -inf
        %1358 = vmax.xlane.f32.xlu0 %v1357
        %v1359 = vpop.xlane.xlu0 %1358
        %v1360 = vsel %vm735, %v1263, -inf
        %1361 = vmax.xlane.f32.xlu0 %v1360
        %v1362 = vpop.xlane.xlu0 %1361
        %v1363 = vsel %vm735, %v1339, -inf
        %1364 = vmax.xlane.f32.xlu0 %v1363
        %v1365 = vpop.xlane.xlu0 %1364
        %v1366 = vsub.f32 %v807, %v1344
        %v1367 = vsub.f32 %v883, %v1347
        %v1368 = vsub.f32 %v959, %v1350
        %v1369 = vsub.f32 %v1035, %v1353
        %v1370 = vsub.f32 %v1111, %v1356
        %v1371 = vsub.f32 %v1187, %v1359
        %v1372 = vsub.f32 %v1263, %v1362
        %v1373 = vsub.f32 %v1339, %v1365
        %v1374 = vmul.f32 %v1366, 1.442695
        %v1375 = vpow.pop %v1374
        %v1376 = vmul.f32 %v1367, 1.442695
        %v1377 = vpow.pop %v1376
        %v1378 = vmul.f32 %v1368, 1.442695
        %v1379 = vpow.pop %v1378
        %v1380 = vmul.f32 %v1369, 1.442695
        %v1381 = vpow.pop %v1380
        %v1382 = vmul.f32 %v1370, 1.442695
        %v1383 = vpow.pop %v1382
        %v1384 = vmul.f32 %v1371, 1.442695
        %v1385 = vpow.pop %v1384
        %v1386 = vmul.f32 %v1372, 1.442695
        %v1387 = vpow.pop %v1386
        %v1388 = vmul.f32 %v1373, 1.442695
        %v1389 = vpow.pop %v1388
        %v1390 = vsel %vm735, %v1375, 0.0
        %1391 = vadd.xlane.f32.xlu0 %v1390
        %v1392 = vpop.xlane.xlu0 %1391
        %v1393 = vsel %vm735, %v1377, 0.0
        %1394 = vadd.xlane.f32.xlu0 %v1393
        %v1395 = vpop.xlane.xlu0 %1394
        %v1396 = vsel %vm735, %v1379, 0.0
        %1397 = vadd.xlane.f32.xlu0 %v1396
        %v1398 = vpop.xlane.xlu0 %1397
        %v1399 = vsel %vm735, %v1381, 0.0
        %1400 = vadd.xlane.f32.xlu0 %v1399
        %v1401 = vpop.xlane.xlu0 %1400
        %v1402 = vsel %vm735, %v1383, 0.0
        %1403 = vadd.xlane.f32.xlu0 %v1402
        %v1404 = vpop.xlane.xlu0 %1403
        %v1405 = vsel %vm735, %v1385, 0.0
        %1406 = vadd.xlane.f32.xlu0 %v1405
        %v1407 = vpop.xlane.xlu0 %1406
        %v1408 = vsel %vm735, %v1387, 0.0
        %1409 = vadd.xlane.f32.xlu0 %v1408
        %v1410 = vpop.xlane.xlu0 %1409
        %v1411 = vsel %vm735, %v1389, 0.0
        %1412 = vadd.xlane.f32.xlu0 %v1411
        %v1413 = vpop.xlane.xlu0 %1412
        %v1414 = vrcp.pop %v1392
        %v1415 = vmul.f32 %v1375, %v1414
        %v1416 = vrcp.pop %v1395
        %v1417 = vmul.f32 %v1377, %v1416
        %v1418 = vrcp.pop %v1398
        %v1419 = vmul.f32 %v1379, %v1418
        %v1420 = vrcp.pop %v1401
        %v1421 = vmul.f32 %v1381, %v1420
        %v1422 = vrcp.pop %v1404
        %v1423 = vmul.f32 %v1383, %v1422
        %v1424 = vrcp.pop %v1407
        %v1425 = vmul.f32 %v1385, %v1424
        %v1426 = vrcp.pop %v1410
        %v1427 = vmul.f32 %v1387, %v1426
        %v1428 = vrcp.pop %v1413
        %v1429 = vmul.f32 %v1389, %v1428
        %1430 = vrot.lane.b32.xlu0 %v711, 64
        %v1431 = vpop.permute.xlu0 %1430
        %v1434 = vsel %vm735, %v1415, 0
        %1436 = vmatprep.subr.mxu0 0.0
        %1437 = vmatpush1.msra.mxu0 %v1431
        %1438 = vmatprep.subr.mxu0 0.0
        %1439 = vmatpush1.msra.mxu0 0.0
        %1440 = vmatprep.subr.mxu0 0.0
        %1441 = vmatpush1.msra.mxu0 0.0
        %1442 = vmatprep.subr.mxu0 0.0
        %1443 = vmatpush1.msra.mxu0 0.0
        %1444 = vmatprep.subr.mxu0 0.0
        %1445 = vmatpush1.msra.mxu0 0.0
        %1446 = vmatprep.subr.mxu0 0.0
        %1447 = vmatpush1.msra.mxu0 0.0
        %1448 = vmatprep.subr.mxu0 0.0
        %1449 = vmatpush1.msra.mxu0 0.0
        %1450 = vmatprep.subr.mxu0 0.0
        %1451 = vmatpush1.msra.mxu0 0.0
        %1452 = vmatprep.subr.mxu0 0.0
        %1453 = vmatpush1.msra.mxu0 0.0
        %1454 = vmatprep.subr.mxu0 0.0
        %1455 = vmatpush1.msra.mxu0 0.0
        %1456 = vmatprep.subr.mxu0 0.0
        %1457 = vmatpush1.msra.mxu0 0.0
        %1458 = vmatprep.subr.mxu0 0.0
        %1459 = vmatpush1.msra.mxu0 0.0
        %1460 = vmatprep.subr.mxu0 0.0
        %1461 = vmatpush1.msra.mxu0 0.0
        %1462 = vmatprep.subr.mxu0 0.0
        %1463 = vmatpush1.msra.mxu0 0.0
        %1464 = vmatprep.subr.mxu0 0.0
        %1465 = vmatpush1.msra.mxu0 0.0
        %1466 = vmatprep.subr.mxu0 0.0
        %1467 = vmatpush1.msra.mxu0 0.0
        %1468 = vmatprep.subr.mxu0 0.0
        %1469 = vmatpush1.msra.mxu0 0.0
        %1470 = vmatprep.subr.mxu0 0.0
        %1471 = vmatpush1.msra.mxu0 0.0
        %1472 = vmatprep.subr.mxu0 0.0
        %1473 = vmatpush1.msra.mxu0 0.0
        %1474 = vmatprep.subr.mxu0 0.0
        %1475 = vmatpush1.msra.mxu0 0.0
        %1476 = vmatprep.subr.mxu0 0.0
        %1477 = vmatpush1.msra.mxu0 0.0
        %1478 = vmatprep.subr.mxu0 0.0
        %1479 = vmatpush1.msra.mxu0 0.0
        %1480 = vmatprep.subr.mxu0 0.0
        %1481 = vmatpush1.msra.mxu0 0.0
        %1482 = vmatprep.subr.mxu0 0.0
        %1483 = vmatpush1.msra.mxu0 0.0
        %1484 = vmatprep.subr.mxu0 0.0
        %1485 = vmatpush1.msra.mxu0 0.0
        %1486 = vmatprep.subr.mxu0 0.0
        %1487 = vmatpush1.msra.mxu0 0.0
        %1488 = vmatprep.subr.mxu0 0.0
        %1489 = vmatpush1.msra.mxu0 0.0
        %1490 = vmatprep.subr.mxu0 0.0
        %1491 = vmatpush1.msra.mxu0 0.0
        %1492 = vmatprep.subr.mxu0 0.0
        %1493 = vmatpush1.msra.mxu0 0.0
        %1494 = vmatprep.subr.mxu0 0.0
        %1495 = vmatpush1.msra.mxu0 0.0
        %1496 = vmatprep.subr.mxu0 0.0
        %1497 = vmatpush1.msra.mxu0 0.0
        %1498 = vmatprep.subr.mxu0 0.0
        %1499 = vmatpush1.msra.mxu0 0.0
        %1500 = vmatprep.mubr.f32.mxu0 0.0
        %1501 = vmatmul.mubr.f32.gmra.mrb[0].mxu0 %v1434
        %v1502 = vpop.f32.mrb[0].mxu0
        %v1503 = vadd.f32 0.0, %v1502
        %v1504 = vpop.f32.mrb[0].mxu0
        %1505 = vdwg.mxu0
        %1506 = vrot.lane.b32.xlu0 %v716, 64
        %v1507 = vpop.permute.xlu0 %1506
        %v1510 = vsel %vm735, %v1417, 0
        %1512 = vmatprep.subr.mxu0 0.0
        %1513 = vmatpush1.msra.mxu0 %v1507
        %1514 = vmatprep.subr.mxu0 0.0
        %1515 = vmatpush1.msra.mxu0 0.0
        %1516 = vmatprep.subr.mxu0 0.0
        %1517 = vmatpush1.msra.mxu0 0.0
        %1518 = vmatprep.subr.mxu0 0.0
        %1519 = vmatpush1.msra.mxu0 0.0
        %1520 = vmatprep.subr.mxu0 0.0
        %1521 = vmatpush1.msra.mxu0 0.0
        %1522 = vmatprep.subr.mxu0 0.0
        %1523 = vmatpush1.msra.mxu0 0.0
        %1524 = vmatprep.subr.mxu0 0.0
        %1525 = vmatpush1.msra.mxu0 0.0
        %1526 = vmatprep.subr.mxu0 0.0
        %1527 = vmatpush1.msra.mxu0 0.0
        %1528 = vmatprep.subr.mxu0 0.0
        %1529 = vmatpush1.msra.mxu0 0.0
        %1530 = vmatprep.subr.mxu0 0.0
        %1531 = vmatpush1.msra.mxu0 0.0
        %1532 = vmatprep.subr.mxu0 0.0
        %1533 = vmatpush1.msra.mxu0 0.0
        %1534 = vmatprep.subr.mxu0 0.0
        %1535 = vmatpush1.msra.mxu0 0.0
        %1536 = vmatprep.subr.mxu0 0.0
        %1537 = vmatpush1.msra.mxu0 0.0
        %1538 = vmatprep.subr.mxu0 0.0
        %1539 = vmatpush1.msra.mxu0 0.0
        %1540 = vmatprep.subr.mxu0 0.0
        %1541 = vmatpush1.msra.mxu0 0.0
        %1542 = vmatprep.subr.mxu0 0.0
        %1543 = vmatpush1.msra.mxu0 0.0
        %1544 = vmatprep.subr.mxu0 0.0
        %1545 = vmatpush1.msra.mxu0 0.0
        %1546 = vmatprep.subr.mxu0 0.0
        %1547 = vmatpush1.msra.mxu0 0.0
        %1548 = vmatprep.subr.mxu0 0.0
        %1549 = vmatpush1.msra.mxu0 0.0
        %1550 = vmatprep.subr.mxu0 0.0
        %1551 = vmatpush1.msra.mxu0 0.0
        %1552 = vmatprep.subr.mxu0 0.0
        %1553 = vmatpush1.msra.mxu0 0.0
        %1554 = vmatprep.subr.mxu0 0.0
        %1555 = vmatpush1.msra.mxu0 0.0
        %1556 = vmatprep.subr.mxu0 0.0
        %1557 = vmatpush1.msra.mxu0 0.0
        %1558 = vmatprep.subr.mxu0 0.0
        %1559 = vmatpush1.msra.mxu0 0.0
        %1560 = vmatprep.subr.mxu0 0.0
        %1561 = vmatpush1.msra.mxu0 0.0
        %1562 = vmatprep.subr.mxu0 0.0
        %1563 = vmatpush1.msra.mxu0 0.0
        %1564 = vmatprep.subr.mxu0 0.0
        %1565 = vmatpush1.msra.mxu0 0.0
        %1566 = vmatprep.subr.mxu0 0.0
        %1567 = vmatpush1.msra.mxu0 0.0
        %1568 = vmatprep.subr.mxu0 0.0
        %1569 = vmatpush1.msra.mxu0 0.0
        %1570 = vmatprep.subr.mxu0 0.0
        %1571 = vmatpush1.msra.mxu0 0.0
        %1572 = vmatprep.subr.mxu0 0.0
        %1573 = vmatpush1.msra.mxu0 0.0
        %1574 = vmatprep.subr.mxu0 0.0
        %1575 = vmatpush1.msra.mxu0 0.0
        %1576 = vmatprep.mubr.f32.mxu0 0.0
        %1577 = vmatmul.mubr.f32.gmra.mrb[0].mxu0 %v1510
        %v1578 = vpop.f32.mrb[0].mxu0
        %v1579 = vadd.f32 0.0, %v1578
        %v1580 = vpop.f32.mrb[0].mxu0
        %1581 = vdwg.mxu0
        %1582 = vrot.lane.b32.xlu0 %v722, 64
        %v1583 = vpop.permute.xlu0 %1582
        %v1586 = vsel %vm735, %v1419, 0
        %1588 = vmatprep.subr.mxu0 0.0
        %1589 = vmatpush1.msra.mxu0 %v1583
        %1590 = vmatprep.subr.mxu0 0.0
        %1591 = vmatpush1.msra.mxu0 0.0
        %1592 = vmatprep.subr.mxu0 0.0
        %1593 = vmatpush1.msra.mxu0 0.0
        %1594 = vmatprep.subr.mxu0 0.0
        %1595 = vmatpush1.msra.mxu0 0.0
        %1596 = vmatprep.subr.mxu0 0.0
        %1597 = vmatpush1.msra.mxu0 0.0
        %1598 = vmatprep.subr.mxu0 0.0
        %1599 = vmatpush1.msra.mxu0 0.0
        %1600 = vmatprep.subr.mxu0 0.0
        %1601 = vmatpush1.msra.mxu0 0.0
        %1602 = vmatprep.subr.mxu0 0.0
        %1603 = vmatpush1.msra.mxu0 0.0
        %1604 = vmatprep.subr.mxu0 0.0
        %1605 = vmatpush1.msra.mxu0 0.0
        %1606 = vmatprep.subr.mxu0 0.0
        %1607 = vmatpush1.msra.mxu0 0.0
        %1608 = vmatprep.subr.mxu0 0.0
        %1609 = vmatpush1.msra.mxu0 0.0
        %1610 = vmatprep.subr.mxu0 0.0
        %1611 = vmatpush1.msra.mxu0 0.0
        %1612 = vmatprep.subr.mxu0 0.0
        %1613 = vmatpush1.msra.mxu0 0.0
        %1614 = vmatprep.subr.mxu0 0.0
        %1615 = vmatpush1.msra.mxu0 0.0
        %1616 = vmatprep.subr.mxu0 0.0
        %1617 = vmatpush1.msra.mxu0 0.0
        %1618 = vmatprep.subr.mxu0 0.0
        %1619 = vmatpush1.msra.mxu0 0.0
        %1620 = vmatprep.subr.mxu0 0.0
        %1621 = vmatpush1.msra.mxu0 0.0
        %1622 = vmatprep.subr.mxu0 0.0
        %1623 = vmatpush1.msra.mxu0 0.0
        %1624 = vmatprep.subr.mxu0 0.0
        %1625 = vmatpush1.msra.mxu0 0.0
        %1626 = vmatprep.subr.mxu0 0.0
        %1627 = vmatpush1.msra.mxu0 0.0
        %1628 = vmatprep.subr.mxu0 0.0
        %1629 = vmatpush1.msra.mxu0 0.0
        %1630 = vmatprep.subr.mxu0 0.0
        %1631 = vmatpush1.msra.mxu0 0.0
        %1632 = vmatprep.subr.mxu0 0.0
        %1633 = vmatpush1.msra.mxu0 0.0
        %1634 = vmatprep.subr.mxu0 0.0
        %1635 = vmatpush1.msra.mxu0 0.0
        %1636 = vmatprep.subr.mxu0 0.0
        %1637 = vmatpush1.msra.mxu0 0.0
        %1638 = vmatprep.subr.mxu0 0.0
        %1639 = vmatpush1.msra.mxu0 0.0
        %1640 = vmatprep.subr.mxu0 0.0
        %1641 = vmatpush1.msra.mxu0 0.0
        %1642 = vmatprep.subr.mxu0 0.0
        %1643 = vmatpush1.msra.mxu0 0.0
        %1644 = vmatprep.subr.mxu0 0.0
        %1645 = vmatpush1.msra.mxu0 0.0
        %1646 = vmatprep.subr.mxu0 0.0
        %1647 = vmatpush1.msra.mxu0 0.0
        %1648 = vmatprep.subr.mxu0 0.0
        %1649 = vmatpush1.msra.mxu0 0.0
        %1650 = vmatprep.subr.mxu0 0.0
        %1651 = vmatpush1.msra.mxu0 0.0
        %1652 = vmatprep.mubr.f32.mxu0 0.0
        %1653 = vmatmul.mubr.f32.gmra.mrb[0].mxu0 %v1586
        %v1654 = vpop.f32.mrb[0].mxu0
        %v1655 = vadd.f32 0.0, %v1654
        %v1656 = vpop.f32.mrb[0].mxu0
        %1657 = vdwg.mxu0
        %1658 = vrot.lane.b32.xlu0 %v724, 64
        %v1659 = vpop.permute.xlu0 %1658
        %v1662 = vsel %vm735, %v1421, 0
        %1664 = vmatprep.subr.mxu0 0.0
        %1665 = vmatpush1.msra.mxu0 %v1659
        %1666 = vmatprep.subr.mxu0 0.0
        %1667 = vmatpush1.msra.mxu0 0.0
        %1668 = vmatprep.subr.mxu0 0.0
        %1669 = vmatpush1.msra.mxu0 0.0
        %1670 = vmatprep.subr.mxu0 0.0
        %1671 = vmatpush1.msra.mxu0 0.0
        %1672 = vmatprep.subr.mxu0 0.0
        %1673 = vmatpush1.msra.mxu0 0.0
        %1674 = vmatprep.subr.mxu0 0.0
        %1675 = vmatpush1.msra.mxu0 0.0
        %1676 = vmatprep.subr.mxu0 0.0
        %1677 = vmatpush1.msra.mxu0 0.0
        %1678 = vmatprep.subr.mxu0 0.0
        %1679 = vmatpush1.msra.mxu0 0.0
        %1680 = vmatprep.subr.mxu0 0.0
        %1681 = vmatpush1.msra.mxu0 0.0
        %1682 = vmatprep.subr.mxu0 0.0
        %1683 = vmatpush1.msra.mxu0 0.0
        %1684 = vmatprep.subr.mxu0 0.0
        %1685 = vmatpush1.msra.mxu0 0.0
        %1686 = vmatprep.subr.mxu0 0.0
        %1687 = vmatpush1.msra.mxu0 0.0
        %1688 = vmatprep.subr.mxu0 0.0
        %1689 = vmatpush1.msra.mxu0 0.0
        %1690 = vmatprep.subr.mxu0 0.0
        %1691 = vmatpush1.msra.mxu0 0.0
        %1692 = vmatprep.subr.mxu0 0.0
        %1693 = vmatpush1.msra.mxu0 0.0
        %1694 = vmatprep.subr.mxu0 0.0
        %1695 = vmatpush1.msra.mxu0 0.0
        %1696 = vmatprep.subr.mxu0 0.0
        %1697 = vmatpush1.msra.mxu0 0.0
        %1698 = vmatprep.subr.mxu0 0.0
        %1699 = vmatpush1.msra.mxu0 0.0
        %1700 = vmatprep.subr.mxu0 0.0
        %1701 = vmatpush1.msra.mxu0 0.0
        %1702 = vmatprep.subr.mxu0 0.0
        %1703 = vmatpush1.msra.mxu0 0.0
        %1704 = vmatprep.subr.mxu0 0.0
        %1705 = vmatpush1.msra.mxu0 0.0
        %1706 = vmatprep.subr.mxu0 0.0
        %1707 = vmatpush1.msra.mxu0 0.0
        %1708 = vmatprep.subr.mxu0 0.0
        %1709 = vmatpush1.msra.mxu0 0.0
        %1710 = vmatprep.subr.mxu0 0.0
        %1711 = vmatpush1.msra.mxu0 0.0
        %1712 = vmatprep.subr.mxu0 0.0
        %1713 = vmatpush1.msra.mxu0 0.0
        %1714 = vmatprep.subr.mxu0 0.0
        %1715 = vmatpush1.msra.mxu0 0.0
        %1716 = vmatprep.subr.mxu0 0.0
        %1717 = vmatpush1.msra.mxu0 0.0
        %1718 = vmatprep.subr.mxu0 0.0
        %1719 = vmatpush1.msra.mxu0 0.0
        %1720 = vmatprep.subr.mxu0 0.0
        %1721 = vmatpush1.msra.mxu0 0.0
        %1722 = vmatprep.subr.mxu0 0.0
        %1723 = vmatpush1.msra.mxu0 0.0
        %1724 = vmatprep.subr.mxu0 0.0
        %1725 = vmatpush1.msra.mxu0 0.0
        %1726 = vmatprep.subr.mxu0 0.0
        %1727 = vmatpush1.msra.mxu0 0.0
        %1728 = vmatprep.mubr.f32.mxu0 0.0
        %1729 = vmatmul.mubr.f32.gmra.mrb[0].mxu0 %v1662
        %v1730 = vpop.f32.mrb[0].mxu0
        %v1731 = vadd.f32 0.0, %v1730
        %v1732 = vpop.f32.mrb[0].mxu0
        %1733 = vdwg.mxu0
        %1734 = vrot.lane.b32.xlu0 %v726, 64
        %v1735 = vpop.permute.xlu0 %1734
        %v1738 = vsel %vm735, %v1423, 0
        %1740 = vmatprep.subr.mxu0 0.0
        %1741 = vmatpush1.msra.mxu0 %v1735
        %1742 = vmatprep.subr.mxu0 0.0
        %1743 = vmatpush1.msra.mxu0 0.0
        %1744 = vmatprep.subr.mxu0 0.0
        %1745 = vmatpush1.msra.mxu0 0.0
        %1746 = vmatprep.subr.mxu0 0.0
        %1747 = vmatpush1.msra.mxu0 0.0
        %1748 = vmatprep.subr.mxu0 0.0
        %1749 = vmatpush1.msra.mxu0 0.0
        %1750 = vmatprep.subr.mxu0 0.0
        %1751 = vmatpush1.msra.mxu0 0.0
        %1752 = vmatprep.subr.mxu0 0.0
        %1753 = vmatpush1.msra.mxu0 0.0
        %1754 = vmatprep.subr.mxu0 0.0
        %1755 = vmatpush1.msra.mxu0 0.0
        %1756 = vmatprep.subr.mxu0 0.0
        %1757 = vmatpush1.msra.mxu0 0.0
        %1758 = vmatprep.subr.mxu0 0.0
        %1759 = vmatpush1.msra.mxu0 0.0
        %1760 = vmatprep.subr.mxu0 0.0
        %1761 = vmatpush1.msra.mxu0 0.0
        %1762 = vmatprep.subr.mxu0 0.0
        %1763 = vmatpush1.msra.mxu0 0.0
        %1764 = vmatprep.subr.mxu0 0.0
        %1765 = vmatpush1.msra.mxu0 0.0
        %1766 = vmatprep.subr.mxu0 0.0
        %1767 = vmatpush1.msra.mxu0 0.0
        %1768 = vmatprep.subr.mxu0 0.0
        %1769 = vmatpush1.msra.mxu0 0.0
        %1770 = vmatprep.subr.mxu0 0.0
        %1771 = vmatpush1.msra.mxu0 0.0
        %1772 = vmatprep.subr.mxu0 0.0
        %1773 = vmatpush1.msra.mxu0 0.0
        %1774 = vmatprep.subr.mxu0 0.0
        %1775 = vmatpush1.msra.mxu0 0.0
        %1776 = vmatprep.subr.mxu0 0.0
        %1777 = vmatpush1.msra.mxu0 0.0
        %1778 = vmatprep.subr.mxu0 0.0
        %1779 = vmatpush1.msra.mxu0 0.0
        %1780 = vmatprep.subr.mxu0 0.0
        %1781 = vmatpush1.msra.mxu0 0.0
        %1782 = vmatprep.subr.mxu0 0.0
        %1783 = vmatpush1.msra.mxu0 0.0
        %1784 = vmatprep.subr.mxu0 0.0
        %1785 = vmatpush1.msra.mxu0 0.0
        %1786 = vmatprep.subr.mxu0 0.0
        %1787 = vmatpush1.msra.mxu0 0.0
        %1788 = vmatprep.subr.mxu0 0.0
        %1789 = vmatpush1.msra.mxu0 0.0
        %1790 = vmatprep.subr.mxu0 0.0
        %1791 = vmatpush1.msra.mxu0 0.0
        %1792 = vmatprep.subr.mxu0 0.0
        %1793 = vmatpush1.msra.mxu0 0.0
        %1794 = vmatprep.subr.mxu0 0.0
        %1795 = vmatpush1.msra.mxu0 0.0
        %1796 = vmatprep.subr.mxu0 0.0
        %1797 = vmatpush1.msra.mxu0 0.0
        %1798 = vmatprep.subr.mxu0 0.0
        %1799 = vmatpush1.msra.mxu0 0.0
        %1800 = vmatprep.subr.mxu0 0.0
        %1801 = vmatpush1.msra.mxu0 0.0
        %1802 = vmatprep.subr.mxu0 0.0
        %1803 = vmatpush1.msra.mxu0 0.0
        %1804 = vmatprep.mubr.f32.mxu0 0.0
        %1805 = vmatmul.mubr.f32.gmra.mrb[0].mxu0 %v1738
        %v1806 = vpop.f32.mrb[0].mxu0
        %v1807 = vadd.f32 0.0, %v1806
        %v1808 = vpop.f32.mrb[0].mxu0
        %1809 = vdwg.mxu0
        %1810 = vrot.lane.b32.xlu0 %v728, 64
        %v1811 = vpop.permute.xlu0 %1810
        %v1814 = vsel %vm735, %v1425, 0
        %1816 = vmatprep.subr.mxu0 0.0
        %1817 = vmatpush1.msra.mxu0 %v1811
        %1818 = vmatprep.subr.mxu0 0.0
        %1819 = vmatpush1.msra.mxu0 0.0
        %1820 = vmatprep.subr.mxu0 0.0
        %1821 = vmatpush1.msra.mxu0 0.0
        %1822 = vmatprep.subr.mxu0 0.0
        %1823 = vmatpush1.msra.mxu0 0.0
        %1824 = vmatprep.subr.mxu0 0.0
        %1825 = vmatpush1.msra.mxu0 0.0
        %1826 = vmatprep.subr.mxu0 0.0
        %1827 = vmatpush1.msra.mxu0 0.0
        %1828 = vmatprep.subr.mxu0 0.0
        %1829 = vmatpush1.msra.mxu0 0.0
        %1830 = vmatprep.subr.mxu0 0.0
        %1831 = vmatpush1.msra.mxu0 0.0
        %1832 = vmatprep.subr.mxu0 0.0
        %1833 = vmatpush1.msra.mxu0 0.0
        %1834 = vmatprep.subr.mxu0 0.0
        %1835 = vmatpush1.msra.mxu0 0.0
        %1836 = vmatprep.subr.mxu0 0.0
        %1837 = vmatpush1.msra.mxu0 0.0
        %1838 = vmatprep.subr.mxu0 0.0
        %1839 = vmatpush1.msra.mxu0 0.0
        %1840 = vmatprep.subr.mxu0 0.0
        %1841 = vmatpush1.msra.mxu0 0.0
        %1842 = vmatprep.subr.mxu0 0.0
        %1843 = vmatpush1.msra.mxu0 0.0
        %1844 = vmatprep.subr.mxu0 0.0
        %1845 = vmatpush1.msra.mxu0 0.0
        %1846 = vmatprep.subr.mxu0 0.0
        %1847 = vmatpush1.msra.mxu0 0.0
        %1848 = vmatprep.subr.mxu0 0.0
        %1849 = vmatpush1.msra.mxu0 0.0
        %1850 = vmatprep.subr.mxu0 0.0
        %1851 = vmatpush1.msra.mxu0 0.0
        %1852 = vmatprep.subr.mxu0 0.0
        %1853 = vmatpush1.msra.mxu0 0.0
        %1854 = vmatprep.subr.mxu0 0.0
        %1855 = vmatpush1.msra.mxu0 0.0
        %1856 = vmatprep.subr.mxu0 0.0
        %1857 = vmatpush1.msra.mxu0 0.0
        %1858 = vmatprep.subr.mxu0 0.0
        %1859 = vmatpush1.msra.mxu0 0.0
        %1860 = vmatprep.subr.mxu0 0.0
        %1861 = vmatpush1.msra.mxu0 0.0
        %1862 = vmatprep.subr.mxu0 0.0
        %1863 = vmatpush1.msra.mxu0 0.0
        %1864 = vmatprep.subr.mxu0 0.0
        %1865 = vmatpush1.msra.mxu0 0.0
        %1866 = vmatprep.subr.mxu0 0.0
        %1867 = vmatpush1.msra.mxu0 0.0
        %1868 = vmatprep.subr.mxu0 0.0
        %1869 = vmatpush1.msra.mxu0 0.0
        %1870 = vmatprep.subr.mxu0 0.0
        %1871 = vmatpush1.msra.mxu0 0.0
        %1872 = vmatprep.subr.mxu0 0.0
        %1873 = vmatpush1.msra.mxu0 0.0
        %1874 = vmatprep.subr.mxu0 0.0
        %1875 = vmatpush1.msra.mxu0 0.0
        %1876 = vmatprep.subr.mxu0 0.0
        %1877 = vmatpush1.msra.mxu0 0.0
        %1878 = vmatprep.subr.mxu0 0.0
        %1879 = vmatpush1.msra.mxu0 0.0
        %1880 = vmatprep.mubr.f32.mxu0 0.0
        %1881 = vmatmul.mubr.f32.gmra.mrb[0].mxu0 %v1814
        %v1882 = vpop.f32.mrb[0].mxu0
        %v1883 = vadd.f32 0.0, %v1882
        %v1884 = vpop.f32.mrb[0].mxu0
        %1885 = vdwg.mxu0
        %1886 = vrot.lane.b32.xlu0 %v730, 64
        %v1887 = vpop.permute.xlu0 %1886
        %v1890 = vsel %vm735, %v1427, 0
        %1892 = vmatprep.subr.mxu0 0.0
        %1893 = vmatpush1.msra.mxu0 %v1887
        %1894 = vmatprep.subr.mxu0 0.0
        %1895 = vmatpush1.msra.mxu0 0.0
        %1896 = vmatprep.subr.mxu0 0.0
        %1897 = vmatpush1.msra.mxu0 0.0
        %1898 = vmatprep.subr.mxu0 0.0
        %1899 = vmatpush1.msra.mxu0 0.0
        %1900 = vmatprep.subr.mxu0 0.0
        %1901 = vmatpush1.msra.mxu0 0.0
        %1902 = vmatprep.subr.mxu0 0.0
        %1903 = vmatpush1.msra.mxu0 0.0
        %1904 = vmatprep.subr.mxu0 0.0
        %1905 = vmatpush1.msra.mxu0 0.0
        %1906 = vmatprep.subr.mxu0 0.0
        %1907 = vmatpush1.msra.mxu0 0.0
        %1908 = vmatprep.subr.mxu0 0.0
        %1909 = vmatpush1.msra.mxu0 0.0
        %1910 = vmatprep.subr.mxu0 0.0
        %1911 = vmatpush1.msra.mxu0 0.0
        %1912 = vmatprep.subr.mxu0 0.0
        %1913 = vmatpush1.msra.mxu0 0.0
        %1914 = vmatprep.subr.mxu0 0.0
        %1915 = vmatpush1.msra.mxu0 0.0
        %1916 = vmatprep.subr.mxu0 0.0
        %1917 = vmatpush1.msra.mxu0 0.0
        %1918 = vmatprep.subr.mxu0 0.0
        %1919 = vmatpush1.msra.mxu0 0.0
        %1920 = vmatprep.subr.mxu0 0.0
        %1921 = vmatpush1.msra.mxu0 0.0
        %1922 = vmatprep.subr.mxu0 0.0
        %1923 = vmatpush1.msra.mxu0 0.0
        %1924 = vmatprep.subr.mxu0 0.0
        %1925 = vmatpush1.msra.mxu0 0.0
        %1926 = vmatprep.subr.mxu0 0.0
        %1927 = vmatpush1.msra.mxu0 0.0
        %1928 = vmatprep.subr.mxu0 0.0
        %1929 = vmatpush1.msra.mxu0 0.0
        %1930 = vmatprep.subr.mxu0 0.0
        %1931 = vmatpush1.msra.mxu0 0.0
        %1932 = vmatprep.subr.mxu0 0.0
        %1933 = vmatpush1.msra.mxu0 0.0
        %1934 = vmatprep.subr.mxu0 0.0
        %1935 = vmatpush1.msra.mxu0 0.0
        %1936 = vmatprep.subr.mxu0 0.0
        %1937 = vmatpush1.msra.mxu0 0.0
        %1938 = vmatprep.subr.mxu0 0.0
        %1939 = vmatpush1.msra.mxu0 0.0
        %1940 = vmatprep.subr.mxu0 0.0
        %1941 = vmatpush1.msra.mxu0 0.0
        %1942 = vmatprep.subr.mxu0 0.0
        %1943 = vmatpush1.msra.mxu0 0.0
        %1944 = vmatprep.subr.mxu0 0.0
        %1945 = vmatpush1.msra.mxu0 0.0
        %1946 = vmatprep.subr.mxu0 0.0
        %1947 = vmatpush1.msra.mxu0 0.0
        %1948 = vmatprep.subr.mxu0 0.0
        %1949 = vmatpush1.msra.mxu0 0.0
        %1950 = vmatprep.subr.mxu0 0.0
        %1951 = vmatpush1.msra.mxu0 0.0
        %1952 = vmatprep.subr.mxu0 0.0
        %1953 = vmatpush1.msra.mxu0 0.0
        %1954 = vmatprep.subr.mxu0 0.0
        %1955 = vmatpush1.msra.mxu0 0.0
        %1956 = vmatprep.mubr.f32.mxu0 0.0
        %1957 = vmatmul.mubr.f32.gmra.mrb[0].mxu0 %v1890
        %v1958 = vpop.f32.mrb[0].mxu0
        %v1959 = vadd.f32 0.0, %v1958
        %v1960 = vpop.f32.mrb[0].mxu0
        %1961 = vdwg.mxu0
        %1962 = vrot.lane.b32.xlu0 %v732, 64
        %v1963 = vpop.permute.xlu0 %1962
        %v1966 = vsel %vm735, %v1429, 0
        %1968 = vmatprep.subr.mxu0 0.0
        %1969 = vmatpush1.msra.mxu0 %v1963
        %1970 = vmatprep.subr.mxu0 0.0
        %1971 = vmatpush1.msra.mxu0 0.0
        %1972 = vmatprep.subr.mxu0 0.0
        %1973 = vmatpush1.msra.mxu0 0.0
        %1974 = vmatprep.subr.mxu0 0.0
        %1975 = vmatpush1.msra.mxu0 0.0
        %1976 = vmatprep.subr.mxu0 0.0
        %1977 = vmatpush1.msra.mxu0 0.0
        %1978 = vmatprep.subr.mxu0 0.0
        %1979 = vmatpush1.msra.mxu0 0.0
        %1980 = vmatprep.subr.mxu0 0.0
        %1981 = vmatpush1.msra.mxu0 0.0
        %1982 = vmatprep.subr.mxu0 0.0
        %1983 = vmatpush1.msra.mxu0 0.0
        %1984 = vmatprep.subr.mxu0 0.0
        %1985 = vmatpush1.msra.mxu0 0.0
        %1986 = vmatprep.subr.mxu0 0.0
        %1987 = vmatpush1.msra.mxu0 0.0
        %1988 = vmatprep.subr.mxu0 0.0
        %1989 = vmatpush1.msra.mxu0 0.0
        %1990 = vmatprep.subr.mxu0 0.0
        %1991 = vmatpush1.msra.mxu0 0.0
        %1992 = vmatprep.subr.mxu0 0.0
        %1993 = vmatpush1.msra.mxu0 0.0
        %1994 = vmatprep.subr.mxu0 0.0
        %1995 = vmatpush1.msra.mxu0 0.0
        %1996 = vmatprep.subr.mxu0 0.0
        %1997 = vmatpush1.msra.mxu0 0.0
        %1998 = vmatprep.subr.mxu0 0.0
        %1999 = vmatpush1.msra.mxu0 0.0
        %2000 = vmatprep.subr.mxu0 0.0
        %2001 = vmatpush1.msra.mxu0 0.0
        %2002 = vmatprep.subr.mxu0 0.0
        %2003 = vmatpush1.msra.mxu0 0.0
        %2004 = vmatprep.subr.mxu0 0.0
        %2005 = vmatpush1.msra.mxu0 0.0
        %2006 = vmatprep.subr.mxu0 0.0
        %2007 = vmatpush1.msra.mxu0 0.0
        %2008 = vmatprep.subr.mxu0 0.0
        %2009 = vmatpush1.msra.mxu0 0.0
        %2010 = vmatprep.subr.mxu0 0.0
        %2011 = vmatpush1.msra.mxu0 0.0
        %2012 = vmatprep.subr.mxu0 0.0
        %2013 = vmatpush1.msra.mxu0 0.0
        %2014 = vmatprep.subr.mxu0 0.0
        %2015 = vmatpush1.msra.mxu0 0.0
        %2016 = vmatprep.subr.mxu0 0.0
        %2017 = vmatpush1.msra.mxu0 0.0
        %2018 = vmatprep.subr.mxu0 0.0
        %2019 = vmatpush1.msra.mxu0 0.0
        %2020 = vmatprep.subr.mxu0 0.0
        %2021 = vmatpush1.msra.mxu0 0.0
        %2022 = vmatprep.subr.mxu0 0.0
        %2023 = vmatpush1.msra.mxu0 0.0
        %2024 = vmatprep.subr.mxu0 0.0
        %2025 = vmatpush1.msra.mxu0 0.0
        %2026 = vmatprep.subr.mxu0 0.0
        %2027 = vmatpush1.msra.mxu0 0.0
        %2028 = vmatprep.subr.mxu0 0.0
        %2029 = vmatpush1.msra.mxu0 0.0
        %2030 = vmatprep.subr.mxu0 0.0
        %2031 = vmatpush1.msra.mxu0 0.0
        %2032 = vmatprep.mubr.f32.mxu0 0.0
        %2033 = vmatmul.mubr.f32.gmra.mrb[0].mxu0 %v1966
        %v2034 = vpop.f32.mrb[0].mxu0
        %v2035 = vadd.f32 0.0, %v2034
        %v2036 = vpop.f32.mrb[0].mxu0
        %2037 = vdwg.mxu0
        %2038 = vst.msk [vmem:[#allocation2] sm:$0xff] %vm735, %v1503
        %2039 = vst.msk [vmem:[#allocation2 + $0x8] sm:$0xff] %vm735, %v1579
        %2042 = vrot.lane.b32.xlu0 %v1655, 8
        %v2043 = vpop.permute.xlu0 %2042
        %2044 = vrot.lane.b32.xlu0 %v1731, 8
        %v2045 = vpop.permute.xlu0 %2044
        %vm2048 = vcmask 130112
        %2049 = vst.msk [vmem:[#allocation2] sm:$0xff] %vm2048, %v2043
        %2050 = vst.msk [vmem:[#allocation2 + $0x8] sm:$0xff] %vm2048, %v2045
        %2053 = vrot.lane.b32.xlu0 %v1807, 16
        %v2054 = vpop.permute.xlu0 %2053
        %2055 = vrot.lane.b32.xlu0 %v1883, 16
        %v2056 = vpop.permute.xlu0 %2055
        %vm2059 = vcmask 195712
        %2060 = vst.msk [vmem:[#allocation2] sm:$0xff] %vm2059, %v2054
        %2061 = vst.msk [vmem:[#allocation2 + $0x8] sm:$0xff] %vm2059, %v2056
        %2064 = vrot.lane.b32.xlu0 %v1959, 24
        %v2065 = vpop.permute.xlu0 %2064
        %2066 = vrot.lane.b32.xlu0 %v2035, 24
        %v2067 = vpop.permute.xlu0 %2066
        %vm2070 = vcmask 261312
        %2071 = vst.msk [vmem:[#allocation2] sm:$0xff] %vm2070, %v2065
        %2072 = vst.msk [vmem:[#allocation2 + $0x8] sm:$0xff] %vm2070, %v2067
        %v2073 = vld [vmem:[#allocation2] sm:$0xff]
        %v2074 = vld [vmem:[#allocation2 + $0x8] sm:$0xff]
        %v2075 = vld [vmem:[%s556] sm:$0xff]
        %v2076 = vld [vmem:[%s556 + $0x8] sm:$0xff]
        %v2077 = vld [vmem:[%s556 + $0x10] sm:$0xff]
        %v2078 = vld [vmem:[%s556 + $0x18] sm:$0xff]
        %v2080 = vsel %vm590, %v2073, 0
        %v2083 = vsel %vm590, %v2074, 0
        %2085 = vmatprep.subr.mxu0 0.0
        %2086 = vmatpush1.msra.mxu0 %v2075
        %2087 = vmatprep.subr.mxu0 0.0
        %2088 = vmatpush1.msra.mxu0 %v2076
        %2089 = vmatprep.subr.mxu0 0.0
        %2090 = vmatpush1.msra.mxu0 %v2077
        %2091 = vmatprep.subr.mxu0 0.0
        %2092 = vmatpush1.msra.mxu0 %v2078
        %2093 = vmatprep.subr.mxu0 0.0
        %2094 = vmatpush1.msra.mxu0 0.0
        %2095 = vmatprep.subr.mxu0 0.0
        %2096 = vmatpush1.msra.mxu0 0.0
        %2097 = vmatprep.subr.mxu0 0.0
        %2098 = vmatpush1.msra.mxu0 0.0
        %2099 = vmatprep.subr.mxu0 0.0
        %2100 = vmatpush1.msra.mxu0 0.0
        %2101 = vmatprep.subr.mxu0 0.0
        %2102 = vmatpush1.msra.mxu0 0.0
        %2103 = vmatprep.subr.mxu0 0.0
        %2104 = vmatpush1.msra.mxu0 0.0
        %2105 = vmatprep.subr.mxu0 0.0
        %2106 = vmatpush1.msra.mxu0 0.0
        %2107 = vmatprep.subr.mxu0 0.0
        %2108 = vmatpush1.msra.mxu0 0.0
        %2109 = vmatprep.subr.mxu0 0.0
        %2110 = vmatpush1.msra.mxu0 0.0
        %2111 = vmatprep.subr.mxu0 0.0
        %2112 = vmatpush1.msra.mxu0 0.0
        %2113 = vmatprep.subr.mxu0 0.0
        %2114 = vmatpush1.msra.mxu0 0.0
        %2115 = vmatprep.subr.mxu0 0.0
        %2116 = vmatpush1.msra.mxu0 0.0
        %2117 = vmatprep.subr.mxu0 0.0
        %2118 = vmatpush1.msra.mxu0 0.0
        %2119 = vmatprep.subr.mxu0 0.0
        %2120 = vmatpush1.msra.mxu0 0.0
        %2121 = vmatprep.subr.mxu0 0.0
        %2122 = vmatpush1.msra.mxu0 0.0
        %2123 = vmatprep.subr.mxu0 0.0
        %2124 = vmatpush1.msra.mxu0 0.0
        %2125 = vmatprep.subr.mxu0 0.0
        %2126 = vmatpush1.msra.mxu0 0.0
        %2127 = vmatprep.subr.mxu0 0.0
        %2128 = vmatpush1.msra.mxu0 0.0
        %2129 = vmatprep.subr.mxu0 0.0
        %2130 = vmatpush1.msra.mxu0 0.0
        %2131 = vmatprep.subr.mxu0 0.0
        %2132 = vmatpush1.msra.mxu0 0.0
        %2133 = vmatprep.subr.mxu0 0.0
        %2134 = vmatpush1.msra.mxu0 0.0
        %2135 = vmatprep.subr.mxu0 0.0
        %2136 = vmatpush1.msra.mxu0 0.0
        %2137 = vmatprep.subr.mxu0 0.0
        %2138 = vmatpush1.msra.mxu0 0.0
        %2139 = vmatprep.subr.mxu0 0.0
        %2140 = vmatpush1.msra.mxu0 0.0
        %2141 = vmatprep.subr.mxu0 0.0
        %2142 = vmatpush1.msra.mxu0 0.0
        %2143 = vmatprep.subr.mxu0 0.0
        %2144 = vmatpush1.msra.mxu0 0.0
        %2145 = vmatprep.subr.mxu0 0.0
        %2146 = vmatpush1.msra.mxu0 0.0
        %2147 = vmatprep.subr.mxu0 0.0
        %2148 = vmatpush1.msra.mxu0 0.0
        %2149 = vmatprep.mubr.f32.mxu0 0.0
        %2150 = vmatmul.mubr.f32.gmra.mrb[0].mxu0 %v2080
        %v2151 = vpop.f32.mrb[0].mxu0
        %v2152 = vadd.f32 0.0, %v2151
        %v2153 = vpop.f32.mrb[0].mxu0
        %2154 = vmatprep.mubr.f32.mxu0 0.0
        %2155 = vmatmul.mubr.f32.gmra.mrb[0].mxu0 %v2083
        %v2156 = vpop.f32.mrb[0].mxu0
        %v2157 = vadd.f32 0.0, %v2156
        %v2158 = vpop.f32.mrb[0].mxu0
        %2159 = vdwg.mxu0
        %v2160 = vadd.f32 %v586, %v2152
        %v2161 = vadd.f32 %v587, %v2157
        %v2162 = vld [vmem:[%s559] sm:$0x1]
        %v2164 = vlaneseq
        %v2165 = vshrl.u32 %v2164, 7
        %v2166 = vsub.s32 0, %v2165
        %v2167 = vrot.slane %v2162, %v2166
        %v2169 = vadd.f32 %v2160, %v2167
        %v2170 = vadd.f32 %v2161, %v2167
        %v2171 = vld [vmem:[%s562] sm:$0x1]
        %v2172 = vld [vmem:[%s565] sm:$0x1]
        %v2173 = vsel %vm590, %v2169, 0.0
        %2174 = vadd.xlane.f32.xlu0 %v2173
        %v2175 = vpop.xlane.xlu0 %2174
        %v2176 = vsel %vm590, %v2170, 0.0
        %2177 = vadd.xlane.f32.xlu0 %v2176
        %v2178 = vpop.xlane.xlu0 %2177
        %v2179 = vmul.f32 %v2175, %v597
        %v2180 = vmul.f32 %v2178, %v597
        %v2181 = vsub.f32 %v2169, %v2179
        %v2182 = vsub.f32 %v2170, %v2180
        %v2183 = vmul.f32 %v2181, %v2181
        %v2184 = vmul.f32 %v2182, %v2182
        %v2185 = vsel %vm590, %v2183, 0.0
        %2186 = vadd.xlane.f32.xlu0 %v2185
        %v2187 = vpop.xlane.xlu0 %2186
        %v2188 = vsel %vm590, %v2184, 0.0
        %2189 = vadd.xlane.f32.xlu0 %v2188
        %v2190 = vpop.xlane.xlu0 %2189
        %v2191 = vmul.f32 %v2187, %v597
        %v2192 = vmul.f32 %v2190, %v597
        %v2193 = vadd.f32 %v2191, 1e-05
        %v2194 = vadd.f32 %v2192, 1e-05
        %v2195 = vrsqrt.pop %v2193
        %v2196 = vrsqrt.pop %v2194
        %v2197 = vmul.f32 %v2181, %v2195
        %v2198 = vmul.f32 %v2182, %v2196
        %v2200 = vlaneseq
        %v2201 = vshrl.u32 %v2200, 7
        %v2202 = vsub.s32 0, %v2201
        %v2203 = vrot.slane %v2171, %v2202
        %v2205 = vmul.f32 %v2197, %v2203
        %v2206 = vmul.f32 %v2198, %v2203
        %v2208 = vlaneseq
        %v2209 = vshrl.u32 %v2208, 7
        %v2210 = vsub.s32 0, %v2209
        %v2211 = vrot.slane %v2172, %v2210
        %v2213 = vadd.f32 %v2205, %v2211
        %v2214 = vadd.f32 %v2206, %v2211
        %v2215 = vld [vmem:[%s469] sm:$0xff]
        %v2216 = vld [vmem:[%s469 + $0x8] sm:$0xff]
        %v2217 = vld [vmem:[%s469 + $0x10] sm:$0xff]
        %v2218 = vld [vmem:[%s469 + $0x18] sm:$0xff]
        %v2219 = vld [vmem:[%s568] sm:$0x1]
        %v2221 = vlaneseq
        %v2222 = vshrl.u32 %v2221, 7
        %v2223 = vsub.s32 0, %v2222
        %v2224 = vrot.slane %v2219, %v2223
        %v2227 = vsel %vm590, %v2213, 0
        %v2230 = vsel %vm590, %v2214, 0
        %2232 = vmatprep.subr.mxu0 0.0
        %2233 = vmatpush1.msra.mxu0 %v2215
        %2234 = vmatprep.subr.mxu0 0.0
        %2235 = vmatpush1.msra.mxu0 %v2216
        %2236 = vmatprep.subr.mxu0 0.0
        %2237 = vmatpush1.msra.mxu0 %v2217
        %2238 = vmatprep.subr.mxu0 0.0
        %2239 = vmatpush1.msra.mxu0 %v2218
        %2240 = vmatprep.subr.mxu0 0.0
        %2241 = vmatpush1.msra.mxu0 0.0
        %2242 = vmatprep.subr.mxu0 0.0
        %2243 = vmatpush1.msra.mxu0 0.0
        %2244 = vmatprep.subr.mxu0 0.0
        %2245 = vmatpush1.msra.mxu0 0.0
        %2246 = vmatprep.subr.mxu0 0.0
        %2247 = vmatpush1.msra.mxu0 0.0
        %2248 = vmatprep.subr.mxu0 0.0
        %2249 = vmatpush1.msra.mxu0 0.0
        %2250 = vmatprep.subr.mxu0 0.0
        %2251 = vmatpush1.msra.mxu0 0.0
        %2252 = vmatprep.subr.mxu0 0.0
        %2253 = vmatpush1.msra.mxu0 0.0
        %2254 = vmatprep.subr.mxu0 0.0
        %2255 = vmatpush1.msra.mxu0 0.0
        %2256 = vmatprep.subr.mxu0 0.0
        %2257 = vmatpush1.msra.mxu0 0.0
        %2258 = vmatprep.subr.mxu0 0.0
        %2259 = vmatpush1.msra.mxu0 0.0
        %2260 = vmatprep.subr.mxu0 0.0
        %2261 = vmatpush1.msra.mxu0 0.0
        %2262 = vmatprep.subr.mxu0 0.0
        %2263 = vmatpush1.msra.mxu0 0.0
        %2264 = vmatprep.subr.mxu0 0.0
        %2265 = vmatpush1.msra.mxu0 0.0
        %2266 = vmatprep.subr.mxu0 0.0
        %2267 = vmatpush1.msra.mxu0 0.0
        %2268 = vmatprep.subr.mxu0 0.0
        %2269 = vmatpush1.msra.mxu0 0.0
        %2270 = vmatprep.subr.mxu0 0.0
        %2271 = vmatpush1.msra.mxu0 0.0
        %2272 = vmatprep.subr.mxu0 0.0
        %2273 = vmatpush1.msra.mxu0 0.0
        %2274 = vmatprep.subr.mxu0 0.0
        %2275 = vmatpush1.msra.mxu0 0.0
        %2276 = vmatprep.subr.mxu0 0.0
        %2277 = vmatpush1.msra.mxu0 0.0
        %2278 = vmatprep.subr.mxu0 0.0
        %2279 = vmatpush1.msra.mxu0 0.0
        %2280 = vmatprep.subr.mxu0 0.0
        %2281 = vmatpush1.msra.mxu0 0.0
        %2282 = vmatprep.subr.mxu0 0.0
        %2283 = vmatpush1.msra.mxu0 0.0
        %2284 = vmatprep.subr.mxu0 0.0
        %2285 = vmatpush1.msra.mxu0 0.0
        %2286 = vmatprep.subr.mxu0 0.0
        %2287 = vmatpush1.msra.mxu0 0.0
        %2288 = vmatprep.subr.mxu0 0.0
        %2289 = vmatpush1.msra.mxu0 0.0
        %2290 = vmatprep.subr.mxu0 0.0
        %2291 = vmatpush1.msra.mxu0 0.0
        %2292 = vmatprep.subr.mxu0 0.0
        %2293 = vmatpush1.msra.mxu0 0.0
        %2294 = vmatprep.subr.mxu0 0.0
        %2295 = vmatpush1.msra.mxu0 0.0
        %2296 = vmatprep.mubr.f32.mxu0 0.0
        %2297 = vmatmul.mubr.f32.gmra.mrb[0].mxu0 %v2227
        %v2298 = vpop.f32.mrb[0].mxu0
        %v2299 = vadd.f32 %v2224, %v2298
        %v2300 = vpop.f32.mrb[0].mxu0
        %2301 = vmatprep.mubr.f32.mxu0 0.0
        %2302 = vmatmul.mubr.f32.gmra.mrb[0].mxu0 %v2230
        %v2303 = vpop.f32.mrb[0].mxu0
        %v2304 = vadd.f32 %v2224, %v2303
        %v2305 = vpop.f32.mrb[0].mxu0
        %2306 = vdwg.mxu0
        %v2307 = vmul.f32 %v2299, 0.5
        %v2308 = vmul.f32 %v2304, 0.5
        %v2309 = vmul.f32 %v2299, 0.70710677
        %v2310 = vmul.f32 %v2304, 0.70710677
        %v2311 = verf.f32.pop %v2309
        %v2312 = verf.f32.pop %v2310
        %v2313 = vadd.f32 %v2311, 1.0
        %v2314 = vadd.f32 %v2312, 1.0
        %v2315 = vmul.f32 %v2307, %v2313
        %v2316 = vmul.f32 %v2308, %v2314
        %v2317 = vld [vmem:[%s573] sm:$0xff]
        %v2318 = vld [vmem:[%s573 + $0x8] sm:$0xff]
        %v2319 = vld [vmem:[%s573 + $0x10] sm:$0xff]
        %v2320 = vld [vmem:[%s573 + $0x18] sm:$0xff]
        %v2321 = vld [vmem:[%s573 + $0x20] sm:$0xff]
        %v2322 = vld [vmem:[%s573 + $0x28] sm:$0xff]
        %v2323 = vld [vmem:[%s573 + $0x30] sm:$0xff]
        %v2324 = vld [vmem:[%s573 + $0x38] sm:$0xff]
        %v2325 = vld [vmem:[%s576] sm:$0x1]
        %v2327 = vlaneseq
        %v2328 = vshrl.u32 %v2327, 7
        %v2329 = vsub.s32 0, %v2328
        %v2330 = vrot.slane %v2325, %v2329
        %vm2332 = vcmask 523264
        %v2334 = vsel %vm2332, %v2315, 0
        %v2337 = vsel %vm2332, %v2316, 0
        %2339 = vmatprep.subr.mxu0 0.0
        %2340 = vmatpush1.msra.mxu0 %v2317
        %2341 = vmatprep.subr.mxu0 0.0
        %2342 = vmatpush1.msra.mxu0 %v2318
        %2343 = vmatprep.subr.mxu0 0.0
        %2344 = vmatpush1.msra.mxu0 %v2319
        %2345 = vmatprep.subr.mxu0 0.0
        %2346 = vmatpush1.msra.mxu0 %v2320
        %2347 = vmatprep.subr.mxu0 0.0
        %2348 = vmatpush1.msra.mxu0 %v2321
        %2349 = vmatprep.subr.mxu0 0.0
        %2350 = vmatpush1.msra.mxu0 %v2322
        %2351 = vmatprep.subr.mxu0 0.0
        %2352 = vmatpush1.msra.mxu0 %v2323
        %2353 = vmatprep.subr.mxu0 0.0
        %2354 = vmatpush1.msra.mxu0 %v2324
        %2355 = vmatprep.subr.mxu0 0.0
        %2356 = vmatpush1.msra.mxu0 0.0
        %2357 = vmatprep.subr.mxu0 0.0
        %2358 = vmatpush1.msra.mxu0 0.0
        %2359 = vmatprep.subr.mxu0 0.0
        %2360 = vmatpush1.msra.mxu0 0.0
        %2361 = vmatprep.subr.mxu0 0.0
        %2362 = vmatpush1.msra.mxu0 0.0
        %2363 = vmatprep.subr.mxu0 0.0
        %2364 = vmatpush1.msra.mxu0 0.0
        %2365 = vmatprep.subr.mxu0 0.0
        %2366 = vmatpush1.msra.mxu0 0.0
        %2367 = vmatprep.subr.mxu0 0.0
        %2368 = vmatpush1.msra.mxu0 0.0
        %2369 = vmatprep.subr.mxu0 0.0
        %2370 = vmatpush1.msra.mxu0 0.0
        %2371 = vmatprep.subr.mxu0 0.0
        %2372 = vmatpush1.msra.mxu0 0.0
        %2373 = vmatprep.subr.mxu0 0.0
        %2374 = vmatpush1.msra.mxu0 0.0
        %2375 = vmatprep.subr.mxu0 0.0
        %2376 = vmatpush1.msra.mxu0 0.0
        %2377 = vmatprep.subr.mxu0 0.0
        %2378 = vmatpush1.msra.mxu0 0.0
        %2379 = vmatprep.subr.mxu0 0.0
        %2380 = vmatpush1.msra.mxu0 0.0
        %2381 = vmatprep.subr.mxu0 0.0
        %2382 = vmatpush1.msra.mxu0 0.0
        %2383 = vmatprep.subr.mxu0 0.0
        %2384 = vmatpush1.msra.mxu0 0.0
        %2385 = vmatprep.subr.mxu0 0.0
        %2386 = vmatpush1.msra.mxu0 0.0
        %2387 = vmatprep.subr.mxu0 0.0
        %2388 = vmatpush1.msra.mxu0 0.0
        %2389 = vmatprep.subr.mxu0 0.0
        %2390 = vmatpush1.msra.mxu0 0.0
        %2391 = vmatprep.subr.mxu0 0.0
        %2392 = vmatpush1.msra.mxu0 0.0
        %2393 = vmatprep.subr.mxu0 0.0
        %2394 = vmatpush1.msra.mxu0 0.0
        %2395 = vmatprep.subr.mxu0 0.0
        %2396 = vmatpush1.msra.mxu0 0.0
        %2397 = vmatprep.subr.mxu0 0.0
        %2398 = vmatpush1.msra.mxu0 0.0
        %2399 = vmatprep.subr.mxu0 0.0
        %2400 = vmatpush1.msra.mxu0 0.0
        %2401 = vmatprep.subr.mxu0 0.0
        %2402 = vmatpush1.msra.mxu0 0.0
        %2403 = vmatprep.mubr.f32.mxu0 0.0
        %2404 = vmatmul.mubr.f32.gmra.mrb[0].mxu0 %v2334
        %v2405 = vpop.f32.mrb[0].mxu0
        %v2406 = vadd.f32 %v2330, %v2405
        %v2407 = vpop.f32.mrb[0].mxu0
        %2408 = vmatprep.mubr.f32.mxu0 0.0
        %2409 = vmatmul.mubr.f32.gmra.mrb[0].mxu0 %v2337
        %v2410 = vpop.f32.mrb[0].mxu0
        %v2411 = vadd.f32 %v2330, %v2410
        %v2412 = vpop.f32.mrb[0].mxu0
        %2413 = vdwg.mxu0
        %v2414 = vadd.f32 %v2169, %v2406
        %v2415 = vadd.f32 %v2170, %v2411
        %2416 = vst.msk [vmem:[%s12] sm:$0xff] %vm590, %v2414
        %2417 = vst.msk [vmem:[%s12 + $0x8] sm:$0xff] %vm590, %v2415
        // Predicated region
        $region77: #{_transformer_forward_impl.1} parent=67 // pred_check
          %p2418 = pneg %p346
        $region78: #{_transformer_forward_impl.1} parent=67 // pred_check_branch
          %2420 = sbr.rel (%p2418) target = $region80
        $region79: #{_transformer_forward_impl.1} parent=67 // pred_region
          _
        $region80: #{_transformer_forward_impl.1} parent=67 // pred_fallthru
          _
        // Predicated region
        $region81: #{_transformer_forward_impl.1} parent=67 // pred_check
          %p2421 = pneg %p346
        $region82: #{_transformer_forward_impl.1} parent=67 // pred_check_branch
          %2423 = sbr.rel (%p2421) target = $region84
        $region83: #{_transformer_forward_impl.1} parent=67 // pred_region
          _
        $region84: #{_transformer_forward_impl.1} parent=67 // pred_fallthru
          _
      $region68: #{_transformer_forward_impl.1} parent=5 // pred_fallthru
        _
      %p2424 = scmp.le.s32.totalorder 2, %s21
      // Predicated region
      $region85: #{_transformer_forward_impl.1} parent=5 // pred_check
        %p2425 = pneg %p2424
      $region86: #{_transformer_forward_impl.1} parent=5 // pred_check_branch
        %2427 = sbr.rel (%p2425) target = $region88
      $region87: #{_transformer_forward_impl.1} parent=5 // pred_region
        %s2428 = ssub.s32 %s21, 2
      $region88: #{_transformer_forward_impl.1} parent=5 // pred_fallthru
        _
    $region6: #{_transformer_forward_impl.1} parent=1 // loop_footer
      %s25 = sadd.s32 1, %s21
    $region7: #{_transformer_forward_impl.1} parent=1 // loop_footer_branch
      %20 = sbr.rel target = $region3
    $region8: #{_transformer_forward_impl.1} parent=1 // loop_exit
      _
    %2429 = vsyncpa [#allocation4], 1
    %s2430 = scalar_lea.sflag [#allocation4], 1
    %2431 = vsyncpa %s2430, 1

</llo_original>
